<compile_context>
chip_gen: v5e
topology: v5e:2x2
jax: 0.10.0
libtpu: 0.0.40
codegen_flags: <defaults>
</compile_context>

<pallas_src>
import functools

import jax
import jax.numpy as jnp
from jax import lax
from jax.experimental import pallas as pl
from jax.experimental.pallas import tpu as pltpu


def _round_up(x, m):
    return ((x + m - 1) // m) * m


def _edge_predictor_kernel(
    x_src_ref,    # (tm, D)           source-node features for this edge tile
    x_dst_ref,    # (n_dst, tm, D)    slab 0 = positive dst, slabs 1.. = negatives
    w_src_t_ref,  # (D, D)            W_src.T
    w_dst_t_ref,  # (D, D)            W_dst.T
    b_sum_ref,    # (1, D)            b_src + b_dst
    w_out_ref,    # (8, D)            row 0 = W_out, rows 1..7 zero padding
    b_out_ref,    # (1,)              SMEM scalar
    scores_ref,   # (8, n_dst * tm)   lane-dense scores; only row 0 is real
):
    n_dst, tm, d = x_dst_ref.shape

    # src_fc (bias folded into b_sum below)
    h_src = jnp.dot(x_src_ref[...], w_src_t_ref[...],
                    preferred_element_type=jnp.float32)            # (tm, D)

    # dst_fc fused over positive + all negative slabs.
    # Leading-dim merge/split reshapes are layout-free because tm % 8 == 0.
    x_dst_flat = x_dst_ref[...].reshape(n_dst * tm, d)
    h_dst = jnp.dot(x_dst_flat, w_dst_t_ref[...],
                    preferred_element_type=jnp.float32)            # (n_dst*tm, D)

    # relu(h_src + h_dst + (b_src + b_dst)) via broadcast (no tile materialization)
    edge = jnp.maximum(
        h_dst.reshape(n_dst, tm, d)
        + h_src[None, :, :]
        + b_sum_ref[...][None, :, :],
        0.0,
    )                                                              # (n_dst, tm, D)

    # out_fc fused across slabs, lane-dense: (8, D) x (n_dst*tm, D)^T -> (8, n_dst*tm)
    s = lax.dot_general(
        w_out_ref[...], edge.reshape(n_dst * tm, d),
        dimension_numbers=(((1,), (1,)), ((), ())),
        preferred_element_type=jnp.float32,
    )

    # Single unmasked full-block store (rows 1..7 are padding, dropped in wrapper).
    scores_ref[...] = (s + b_out_ref[0]).astype(scores_ref.dtype)


def edge_predictor_forward(h, params, neg_samples=1, *, tm=2048):
    """Pallas implementation of EdgePredictor.forward.

    h:      [(neg_samples + 2) * num_edge, dim_in]  float32
    params: W_src [D,D], b_src [D], W_dst [D,D], b_dst [D], W_out [1,D], b_out [1]
            (PyTorch Linear convention: y = x @ W.T + b)
    Returns (pos_scores [num_edge, 1], neg_scores [neg_samples*num_edge, 1]).
    """
    total, d = h.shape
    num_edge = total // (neg_samples + 2)
    n_dst = neg_samples + 1

    x_src = h[:num_edge]                                   # (E, D)
    # h[E:] is already [pos ; neg_0 ; neg_1 ; ...] contiguously -> free reshape
    x_dst = h[num_edge:].reshape(n_dst, num_edge, d)       # (n_dst, E, D)

    # --- tile sizing: big tiles; no input padding (partial last block is OK) ---
    tm_req = max(8, (int(tm) // 8) * 8)
    e8 = _round_up(num_edge, 8)
    if e8 <= 256:
        # Whole edge set fits in one small tile.
        tm_eff = e8
    else:
        lane_tm = max(128, (tm_req // 128) * 128)
        # Cap the tile so the grid has >= 2 steps (v7x has 2 TensorCores).
        tm_eff = max(128, min(lane_tm, _round_up(pl.cdiv(num_edge, 2), 128)))
    num_tiles = pl.cdiv(num_edge, tm_eff)

    # --- parameter prep (wrapper-side, outside the kernel) ---
    w_src_t = params["W_src"].T.astype(jnp.float32)                  # (D, D)
    w_dst_t = params["W_dst"].T.astype(jnp.float32)                  # (D, D)
    b_sum = (params["b_src"] + params["b_dst"]).reshape(1, d).astype(jnp.float32)
    w_out_pad = jnp.zeros((8, d), jnp.float32).at[0, :].set(
        params["W_out"].reshape(d).astype(jnp.float32))              # (8, D)
    b_out = params["b_out"].reshape(1).astype(jnp.float32)           # (1,) SMEM

    block_cols = n_dst * tm_eff
    raw = pl.pallas_call(
        _edge_predictor_kernel,
        out_shape=jax.ShapeDtypeStruct((8, num_tiles * block_cols), jnp.float32),
        grid_spec=pltpu.PrefetchScalarGridSpec(
            num_scalar_prefetch=0,
            grid=(num_tiles,),
            in_specs=[
                pl.BlockSpec((tm_eff, d), lambda i: (i, 0)),              # x_src
                pl.BlockSpec((n_dst, tm_eff, d), lambda i: (0, i, 0)),    # x_dst
                pl.BlockSpec((d, d), lambda i: (0, 0)),                   # W_src.T
                pl.BlockSpec((d, d), lambda i: (0, 0)),                   # W_dst.T
                pl.BlockSpec((1, d), lambda i: (0, 0)),                   # b_src+b_dst
                pl.BlockSpec((8, d), lambda i: (0, 0)),                   # W_out (padded)
                pl.BlockSpec(memory_space=pltpu.MemorySpace.SMEM),        # b_out scalar
            ],
            out_specs=pl.BlockSpec((8, block_cols), lambda i: (0, i)),
        ),
        compiler_params=pltpu.CompilerParams(
            dimension_semantics=("parallel",),
        ),
    )(x_src, x_dst, w_src_t, w_dst_t, b_sum, w_out_pad, b_out)

    # row 0 holds the real scores; columns are [tile0: slab0|slab1|..., tile1: ...]
    scores = raw[0].reshape(num_tiles, n_dst, tm_eff)
    scores = jnp.transpose(scores, (1, 0, 2)).reshape(n_dst, num_tiles * tm_eff)
    scores = scores[:, :num_edge]                          # drop padded-tail columns
    pos = scores[0].reshape(num_edge, 1)
    neg = scores[1:].reshape(neg_samples * num_edge, 1)    # torch tile() ordering
    return pos, neg


def _reference_forward(h, params, neg_samples=1):
    num_edge = h.shape[0] // (neg_samples + 2)
    lin = lambda x, w, b: x @ w.T + b
    h_src = lin(h[:num_edge], params["W_src"], params["b_src"])
    h_pos = lin(h[num_edge:2 * num_edge], params["W_dst"], params["b_dst"])
    h_neg = lin(h[2 * num_edge:], params["W_dst"], params["b_dst"])
    pos_edge = jax.nn.relu(h_src + h_pos)
    neg_edge = jax.nn.relu(jnp.tile(h_src, (neg_samples, 1)) + h_neg)
    out = lambda x: x @ params["W_out"].T + params["b_out"]
    return out(pos_edge), out(neg_edge)


if __name__ == "__main__":
    key = jax.random.PRNGKey(0)

    def make_params(k, dim_in):
        k1, k2, k3, k4, k5, k6 = jax.random.split(k, 6)
        bound = 1.0 / (dim_in ** 0.5)
        u = lambda kk, shape: jax.random.uniform(kk, shape, jnp.float32, -bound, bound)
        return {
            "W_src": u(k1, (dim_in, dim_in)),
            "b_src": u(k2, (dim_in,)),
            "W_dst": u(k3, (dim_in, dim_in)),
            "b_dst": u(k4, (dim_in,)),
            "W_out": u(k5, (1, dim_in)),
            "b_out": u(k6, (1,)),
        }

    cases = [
        (32, 512, 2),   # multi-tile (2 lane-aligned tiles, good for v7x's 2 TCs)
        (32, 300, 1),   # non-divisible edge count -> partial final block, no pad copy
        (32, 96, 1),    # small edge set -> single-tile path
    ]

    for dim_in, num_edge, neg_samples in cases:
        key, kp, kh = jax.random.split(key, 3)
        params = make_params(kp, dim_in)
        h = jax.random.normal(kh, ((neg_samples + 2) * num_edge, dim_in), jnp.float32)

        fwd = jax.jit(functools.partial(edge_predictor_forward,
                                        neg_samples=neg_samples, tm=2048))
        pos_scores, neg_scores = fwd(h, params)
        jax.block_until_ready((pos_scores, neg_scores))

        ref_pos, ref_neg = _reference_forward(h, params, neg_samples)
        assert pos_scores.shape == (num_edge, 1)
        assert neg_scores.shape == (neg_samples * num_edge, 1)
        assert jnp.allclose(pos_scores, ref_pos, atol=1e-4, rtol=1e-4)
        assert jnp.allclose(neg_scores, ref_neg, atol=1e-4, rtol=1e-4)

    print("KERNEL_OK")
</pallas_src>

<mosaic_0001>
module attributes {stable_mosaic.version = 11 : i64} {
  func.func @_edge_predictor_kernel(%arg0: i32, %arg1: memref<256x32xf32, #tpu.memory_space<vmem>>, %arg2: memref<3x256x32xf32, #tpu.memory_space<vmem>>, %arg3: memref<32x32xf32, #tpu.memory_space<vmem>>, %arg4: memref<32x32xf32, #tpu.memory_space<vmem>>, %arg5: memref<1x32xf32, #tpu.memory_space<vmem>>, %arg6: memref<8x32xf32, #tpu.memory_space<vmem>>, %arg7: memref<1xf32, #tpu.memory_space<smem>>, %arg8: memref<8x768xf32, #tpu.memory_space<vmem>>) attributes {dimension_semantics = [#tpu.dimension_semantics<parallel>], iteration_bounds = array<i64: 2>, scalar_prefetch = 0 : i64, scratch_operands = 0 : i64, tpu.core_type = #tpu.core_type<tc>, window_params = [{transform_indices = @transform_0, window_bounds = array<i64: 256, 32>}, {transform_indices = @transform_1, window_bounds = array<i64: 3, 256, 32>}, {pipeline_mode = #tpu.pipeline_mode<synchronous>, transform_indices = @transform_2, window_bounds = array<i64: 32, 32>}, {pipeline_mode = #tpu.pipeline_mode<synchronous>, transform_indices = @transform_3, window_bounds = array<i64: 32, 32>}, {pipeline_mode = #tpu.pipeline_mode<synchronous>, transform_indices = @transform_4, window_bounds = array<i64: 1, 32>}, {pipeline_mode = #tpu.pipeline_mode<synchronous>, transform_indices = @transform_5, window_bounds = array<i64: 8, 32>}, {transform_indices = @transform_6, window_bounds = array<i64: 1>}, {transform_indices = @transform_7, window_bounds = array<i64: 8, 768>}]} {
    %c0 = arith.constant 0 : index
    %c0_0 = arith.constant 0 : index
    %0 = vector.load %arg1[%c0, %c0_0] : memref<256x32xf32, #tpu.memory_space<vmem>>, vector<256x32xf32>
    %c0_1 = arith.constant 0 : index
    %c0_2 = arith.constant 0 : index
    %1 = vector.load %arg3[%c0_1, %c0_2] : memref<32x32xf32, #tpu.memory_space<vmem>>, vector<32x32xf32>
    %cst = arith.constant dense<0.000000e+00> : vector<256x32xf32>
    %2 = tpu.matmul %0, %1, %cst {dimension_numbers = #tpu.dot_dimension_numbers<[1], [0], [0], [1], [0, 0, 1, 1], [], []>} : vector<256x32xf32>, vector<32x32xf32>, vector<256x32xf32> -> vector<256x32xf32>
    %c0_3 = arith.constant 0 : index
    %c0_4 = arith.constant 0 : index
    %c0_5 = arith.constant 0 : index
    %3 = vector.load %arg2[%c0_3, %c0_4, %c0_5] : memref<3x256x32xf32, #tpu.memory_space<vmem>>, vector<3x256x32xf32>
    %4 = vector.shape_cast %3 : vector<3x256x32xf32> to vector<768x32xf32>
    %c0_6 = arith.constant 0 : index
    %c0_7 = arith.constant 0 : index
    %5 = vector.load %arg4[%c0_6, %c0_7] : memref<32x32xf32, #tpu.memory_space<vmem>>, vector<32x32xf32>
    %cst_8 = arith.constant dense<0.000000e+00> : vector<768x32xf32>
    %6 = tpu.matmul %4, %5, %cst_8 {dimension_numbers = #tpu.dot_dimension_numbers<[1], [0], [0], [1], [0, 0, 1, 1], [], []>} : vector<768x32xf32>, vector<32x32xf32>, vector<768x32xf32> -> vector<768x32xf32>
    %7 = vector.shape_cast %6 : vector<768x32xf32> to vector<3x256x32xf32>
    %8 = vector.shape_cast %2 : vector<256x32xf32> to vector<1x256x32xf32>
    %9 = vector.broadcast %8 : vector<1x256x32xf32> to vector<3x256x32xf32>
    %10 = arith.addf %7, %9 : vector<3x256x32xf32>
    %c0_9 = arith.constant 0 : index
    %c0_10 = arith.constant 0 : index
    %11 = vector.load %arg5[%c0_9, %c0_10] : memref<1x32xf32, #tpu.memory_space<vmem>>, vector<1x32xf32>
    %12 = vector.shape_cast %11 : vector<1x32xf32> to vector<1x1x32xf32>
    %13 = vector.broadcast %12 : vector<1x1x32xf32> to vector<3x256x32xf32>
    %14 = arith.addf %10, %13 : vector<3x256x32xf32>
    %cst_11 = arith.constant 0.000000e+00 : f32
    %15 = vector.broadcast %cst_11 : f32 to vector<3x256x32xf32>
    %16 = arith.maximumf %14, %15 : vector<3x256x32xf32>
    %c0_12 = arith.constant 0 : index
    %c0_13 = arith.constant 0 : index
    %17 = vector.load %arg6[%c0_12, %c0_13] : memref<8x32xf32, #tpu.memory_space<vmem>>, vector<8x32xf32>
    %18 = vector.shape_cast %16 : vector<3x256x32xf32> to vector<768x32xf32>
    %cst_14 = arith.constant dense<0.000000e+00> : vector<8x768xf32>
    %19 = tpu.matmul %17, %18, %cst_14 {dimension_numbers = #tpu.dot_dimension_numbers<[1], [1], [0], [0], [0, 0, 1, 0], [], []>} : vector<8x32xf32>, vector<768x32xf32>, vector<8x768xf32> -> vector<8x768xf32>
    %c0_15 = arith.constant 0 : index
    %20 = memref.load %arg7[%c0_15] : memref<1xf32, #tpu.memory_space<smem>>
    %21 = vector.broadcast %20 : f32 to vector<8x768xf32>
    %22 = arith.addf %19, %21 : vector<8x768xf32>
    %c0_16 = arith.constant 0 : index
    %c0_17 = arith.constant 0 : index
    %23 = vector.load %arg8[%c0_16, %c0_17] : memref<8x768xf32, #tpu.memory_space<vmem>>, vector<8x768xf32>
    tpu.vector_store %arg8[%c0_16, %c0_17], %22 {strides = array<i32>} : memref<8x768xf32, #tpu.memory_space<vmem>>, vector<8x768xf32>,
    return
  }
  func.func @transform_0(%arg0: i32) -> (i32, i32) {
    %c0_i32 = arith.constant 0 : i32
    %c0_i32_0 = arith.constant 0 : i32
    return %arg0, %c0_i32 : i32, i32
  }
  func.func @transform_1(%arg0: i32) -> (i32, i32, i32) {
    %c0_i32 = arith.constant 0 : i32
    %c0_i32_0 = arith.constant 0 : i32
    %c0_i32_1 = arith.constant 0 : i32
    return %c0_i32, %arg0, %c0_i32_0 : i32, i32, i32
  }
  func.func @transform_2(%arg0: i32) -> (i32, i32) {
    %c0_i32 = arith.constant 0 : i32
    %c0_i32_0 = arith.constant 0 : i32
    %c0_i32_1 = arith.constant 0 : i32
    return %c0_i32, %c0_i32_0 : i32, i32
  }
  func.func @transform_3(%arg0: i32) -> (i32, i32) {
    %c0_i32 = arith.constant 0 : i32
    %c0_i32_0 = arith.constant 0 : i32
    %c0_i32_1 = arith.constant 0 : i32
    return %c0_i32, %c0_i32_0 : i32, i32
  }
  func.func @transform_4(%arg0: i32) -> (i32, i32) {
    %c0_i32 = arith.constant 0 : i32
    %c0_i32_0 = arith.constant 0 : i32
    %c0_i32_1 = arith.constant 0 : i32
    return %c0_i32, %c0_i32_0 : i32, i32
  }
  func.func @transform_5(%arg0: i32) -> (i32, i32) {
    %c0_i32 = arith.constant 0 : i32
    %c0_i32_0 = arith.constant 0 : i32
    %c0_i32_1 = arith.constant 0 : i32
    return %c0_i32, %c0_i32_0 : i32, i32
  }
  func.func @transform_6(%arg0: i32) -> i32 {
    %c0_i32 = arith.constant 0 : i32
    %c0_i32_0 = arith.constant 0 : i32
    return %c0_i32 : i32
  }
  func.func @transform_7(%arg0: i32) -> (i32, i32) {
    %c0_i32 = arith.constant 0 : i32
    %c0_i32_0 = arith.constant 0 : i32
    return %c0_i32, %arg0 : i32, i32
  }
}

</mosaic_0001>

<llo_original>
// kernel: squeeze.2
$region0: #{squeeze.2}
  %s0 = inlined_call_operand.vmem [shape: f32[1536], index: 0, kind: input, shape index: {}]
  %s1 = inlined_call_operand.vmem [shape: f32[2,3,256], index: 1, kind: output, shape index: {}]
  $region1: #{squeeze.2} parent=0
    #allocation0 [shape = 'u8[16384]{0}', space=vmem, size = 0x4000, scoped, tag = 'scoped mem for output reshape']
    %v2 = vld [vmem:[%s0] sm:$0xff]
    %3 = vst [vmem:[#allocation0] ss:$8 sm:$0x3] %v2
    %s4 = scalar_lea.vmem [#allocation0], 4294967281
    %5 = vst [vmem:[%s4] ss:$8 sm:$0xc] %v2
    %s6 = scalar_lea.vmem [#allocation0], 4294967266
    %7 = vst [vmem:[%s6] ss:$8 sm:$0x30] %v2
    %s8 = scalar_lea.vmem [#allocation0], 4294967264
    %9 = vst [vmem:[%s8] ss:$8 sm:$0xc0] %v2
    %s10 = scalar_lea.vmem %s0, 8
    %v11 = vld [vmem:[%s10] sm:$0xf]
    %s12 = scalar_lea.vmem [#allocation0], 17
    %13 = vst [vmem:[%s12] ss:$8 sm:$0x3] %v11
    %s14 = scalar_lea.vmem [#allocation0], 2
    %15 = vst [vmem:[%s14] ss:$8 sm:$0xc] %v11
    %s17 = ssub.s32 16, 1
    %v18 = vld [vmem:[#allocation0] sm:%s17]
    %s20 = ssub.s32 16, 1
    %21 = vst [vmem:[%s1] sm:%s20] %v18
    %s22 = scalar_lea.vmem [#allocation0], 8
    %v23 = vld [vmem:[%s22] sm:%s17]
    %s25 = ssub.s32 16, 1
    %s26 = scalar_lea.vmem %s1, 4
    %27 = vst [vmem:[%s26] sm:%s25] %v23
    %s28 = scalar_lea.vmem [#allocation0], 16
    %v29 = vld [vmem:[%s28] sm:%s17]
    %s31 = ssub.s32 16, 1
    %s32 = scalar_lea.vmem %s1, 8
    %33 = vst [vmem:[%s32] sm:%s31] %v29
    %s34 = scalar_lea.vmem [#allocation0], 24
    %v35 = vld [vmem:[%s34] sm:%s17]
    %s37 = ssub.s32 16, 1
    %s38 = scalar_lea.vmem %s1, 12
    %39 = vst [vmem:[%s38] sm:%s37] %v35

// kernel: edge_predictor_forward.1
$region0: #{edge_predictor_forward.1}
  #allocation0 [shape = 'u32[]', space=smem, size = 0x4, offset = 0x4, fixed_abs, tag = 'smem constant byte address 0x4 - core index']
  #allocation1 [shape = 'u32[72,128]{1,0:T(1,128)}', space=vmem, size = 0x9000, scoped, tag = 'internal scratch']
  #allocation2 [shape = 'f32[1]{0:T(128)S(6)}', space=smem, size = 0x200, scoped, tag = 'scoped memory for edge_predictor_forward.1']
  %s0 = inlined_call_operand.vmem [shape: f32[512,32], index: 0, kind: input, shape index: {}]
  %s1 = inlined_call_operand.vmem [shape: f32[3,512,32], index: 1, kind: input, shape index: {}]
  %s2 = inlined_call_operand.vmem [shape: f32[32,32], index: 2, kind: input, shape index: {}]
  %s3 = inlined_call_operand.vmem [shape: f32[32,32], index: 3, kind: input, shape index: {}]
  %s4 = inlined_call_operand.vmem [shape: f32[1,32], index: 4, kind: input, shape index: {}]
  %s5 = inlined_call_operand.vmem [shape: f32[8,32], index: 5, kind: input, shape index: {}]
  %s6 = inlined_call_operand.<no memory space> [shape: f32[1], index: 6, kind: input, shape index: {}]
  %s7 = inlined_call_operand.vmem [shape: f32[8,1536], index: 7, kind: output, shape index: {}]
  %s8 = sld [smem:[#allocation0]]
  $region99: #{edge_predictor_forward.1} parent=0
    _
  %s10 = ssub.s32 1, %s8
  %s11 = scalar_select 0, %s10, %s8
  %12 = sst [smem:[#allocation2]] %s6
  $region1: #{edge_predictor_forward.1} parent=0
    #allocation3 [shape = 'u8[786432]{0}', space=vmem, size = 0xc0000, scoped, tag = 'input window, operand 1']
    loop: start=0, step=1, limit=4
    $region2: #{edge_predictor_forward.1} parent=1 // loop_pre_header
      _
    $region3: #{edge_predictor_forward.1} parent=1 // loop_header
      %s14 = sphi 0, %s18
      %p15 = scmp.ge.s32.totalorder %s14, 4
      %s24 = sphi 0, %s26
      %s27 = sphi 0, %s24
      %s28 = sphi 0, %s27
      %s44 = sphi 0, %s28
      %s50 = sphi 0, %s52
      %s53 = sphi 0, %s50
      %s54 = sphi 0, %s53
      %s70 = sphi 0, %s54
      %s74 = sphi 0, %s74
      %s76 = sphi 0, %s74
      %s77 = sphi 0, %s76
      %s91 = sphi 0, %s77
      %s95 = sphi 0, %s95
      %s97 = sphi 0, %s95
      %s98 = sphi 0, %s97
      %s112 = sphi 0, %s98
      %s116 = sphi 0, %s116
      %s118 = sphi 0, %s116
      %s119 = sphi 0, %s118
      %s133 = sphi 0, %s119
      %s137 = sphi 0, %s137
      %s139 = sphi 0, %s137
      %s140 = sphi 0, %s139
      %s154 = sphi 0, %s140
      %s158 = sphi 0, %s158
      %s160 = sphi 0, %s158
      %s161 = sphi 0, %s160
      %s175 = sphi 0, %s161
      %s181 = sphi 0, %s183
      %s184 = sphi 0, %s181
      %s185 = sphi 0, %s184
      %s201 = sphi 0, %s185
    $region4: #{edge_predictor_forward.1} parent=1 // loop_header_branch
      %17 = sbr.rel (%p15) target = $region8
    $region5: #{edge_predictor_forward.1} parent=1 // loop_body
      %s19 = ssub.s32 %s14, 1
      %s20 = ssub.s32 %s14, 2
      %s21 = sadd.s32 %s14, 1
      %s22 = ssub.s32 %s14, %s21
      %p23 = scmp.eq.s32.totalorder %s22, 0
      %s25 = sadd.s32 %s24, 1
      %s26 = scalar_select %p23, %s24, %s25
      %p29 = pneg %p23
      %p30 = scmp.eq.s32.totalorder %s14, 1
      %p31 = por %p29, %p30
      %p32 = scmp.ne.s32.totalorder %s24, %s27
      %p33 = scmp.eq.s32.totalorder %s14, 0
      %p34 = por %p32, %p33
      %p35 = scmp.ne.s32.totalorder %s24, %s27
      %p36 = scmp.eq.s32.totalorder %s19, 1
      %p37 = por %p35, %p36
      %p38 = scmp.ne.s32.totalorder %s27, %s28
      %p39 = scmp.eq.s32.totalorder %s19, 0
      %p40 = por %p38, %p39
      %p41 = scmp.ne.s32.totalorder %s27, %s28
      %p42 = scmp.eq.s32.totalorder %s20, 1
      %p43 = por %p41, %p42
      %p45 = scmp.ne.s32.totalorder %s28, %s44
      %p46 = scmp.eq.s32.totalorder %s20, 0
      %p47 = por %p45, %p46
      %s48 = ssub.s32 %s14, %s21
      %p49 = scmp.eq.s32.totalorder %s48, 0
      %s51 = sadd.s32 %s50, 1
      %s52 = scalar_select %p49, %s50, %s51
      %p55 = pneg %p49
      %p56 = scmp.eq.s32.totalorder %s14, 1
      %p57 = por %p55, %p56
      %p58 = scmp.ne.s32.totalorder %s50, %s53
      %p59 = scmp.eq.s32.totalorder %s14, 0
      %p60 = por %p58, %p59
      %p61 = scmp.ne.s32.totalorder %s50, %s53
      %p62 = scmp.eq.s32.totalorder %s19, 1
      %p63 = por %p61, %p62
      %p64 = scmp.ne.s32.totalorder %s53, %s54
      %p65 = scmp.eq.s32.totalorder %s19, 0
      %p66 = por %p64, %p65
      %p67 = scmp.ne.s32.totalorder %s53, %s54
      %p68 = scmp.eq.s32.totalorder %s20, 1
      %p69 = por %p67, %p68
      %p71 = scmp.ne.s32.totalorder %s54, %s70
      %p72 = scmp.eq.s32.totalorder %s20, 0
      %p73 = por %p71, %p72
      %s75 = sadd.s32 %s74, 1
      %p78 = scmp.eq.s32.totalorder %s14, 1
      %p79 = scmp.ne.s32.totalorder %s74, %s76
      %p80 = scmp.eq.s32.totalorder %s14, 0
      %p81 = por %p79, %p80
      %p82 = scmp.ne.s32.totalorder %s74, %s76
      %p83 = scmp.eq.s32.totalorder %s19, 1
      %p84 = por %p82, %p83
      %p85 = scmp.ne.s32.totalorder %s76, %s77
      %p86 = scmp.eq.s32.totalorder %s19, 0
      %p87 = por %p85, %p86
      %p88 = scmp.ne.s32.totalorder %s76, %s77
      %p89 = scmp.eq.s32.totalorder %s20, 1
      %p90 = por %p88, %p89
      %p92 = scmp.ne.s32.totalorder %s77, %s91
      %p93 = scmp.eq.s32.totalorder %s20, 0
      %p94 = por %p92, %p93
      %s96 = sadd.s32 %s95, 1
      %p99 = scmp.eq.s32.totalorder %s14, 1
      %p100 = scmp.ne.s32.totalorder %s95, %s97
      %p101 = scmp.eq.s32.totalorder %s14, 0
      %p102 = por %p100, %p101
      %p103 = scmp.ne.s32.totalorder %s95, %s97
      %p104 = scmp.eq.s32.totalorder %s19, 1
      %p105 = por %p103, %p104
      %p106 = scmp.ne.s32.totalorder %s97, %s98
      %p107 = scmp.eq.s32.totalorder %s19, 0
      %p108 = por %p106, %p107
      %p109 = scmp.ne.s32.totalorder %s97, %s98
      %p110 = scmp.eq.s32.totalorder %s20, 1
      %p111 = por %p109, %p110
      %p113 = scmp.ne.s32.totalorder %s98, %s112
      %p114 = scmp.eq.s32.totalorder %s20, 0
      %p115 = por %p113, %p114
      %s117 = sadd.s32 %s116, 1
      %p120 = scmp.eq.s32.totalorder %s14, 1
      %p121 = scmp.ne.s32.totalorder %s116, %s118
      %p122 = scmp.eq.s32.totalorder %s14, 0
      %p123 = por %p121, %p122
      %p124 = scmp.ne.s32.totalorder %s116, %s118
      %p125 = scmp.eq.s32.totalorder %s19, 1
      %p126 = por %p124, %p125
      %p127 = scmp.ne.s32.totalorder %s118, %s119
      %p128 = scmp.eq.s32.totalorder %s19, 0
      %p129 = por %p127, %p128
      %p130 = scmp.ne.s32.totalorder %s118, %s119
      %p131 = scmp.eq.s32.totalorder %s20, 1
      %p132 = por %p130, %p131
      %p134 = scmp.ne.s32.totalorder %s119, %s133
      %p135 = scmp.eq.s32.totalorder %s20, 0
      %p136 = por %p134, %p135
      %s138 = sadd.s32 %s137, 1
      %p141 = scmp.eq.s32.totalorder %s14, 1
      %p142 = scmp.ne.s32.totalorder %s137, %s139
      %p143 = scmp.eq.s32.totalorder %s14, 0
      %p144 = por %p142, %p143
      %p145 = scmp.ne.s32.totalorder %s137, %s139
      %p146 = scmp.eq.s32.totalorder %s19, 1
      %p147 = por %p145, %p146
      %p148 = scmp.ne.s32.totalorder %s139, %s140
      %p149 = scmp.eq.s32.totalorder %s19, 0
      %p150 = por %p148, %p149
      %p151 = scmp.ne.s32.totalorder %s139, %s140
      %p152 = scmp.eq.s32.totalorder %s20, 1
      %p153 = por %p151, %p152
      %p155 = scmp.ne.s32.totalorder %s140, %s154
      %p156 = scmp.eq.s32.totalorder %s20, 0
      %p157 = por %p155, %p156
      %s159 = sadd.s32 %s158, 1
      %p162 = scmp.eq.s32.totalorder %s14, 1
      %p163 = scmp.ne.s32.totalorder %s158, %s160
      %p164 = scmp.eq.s32.totalorder %s14, 0
      %p165 = por %p163, %p164
      %p166 = scmp.ne.s32.totalorder %s158, %s160
      %p167 = scmp.eq.s32.totalorder %s19, 1
      %p168 = por %p166, %p167
      %p169 = scmp.ne.s32.totalorder %s160, %s161
      %p170 = scmp.eq.s32.totalorder %s19, 0
      %p171 = por %p169, %p170
      %p172 = scmp.ne.s32.totalorder %s160, %s161
      %p173 = scmp.eq.s32.totalorder %s20, 1
      %p174 = por %p172, %p173
      %p176 = scmp.ne.s32.totalorder %s161, %s175
      %p177 = scmp.eq.s32.totalorder %s20, 0
      %p178 = por %p176, %p177
      %s179 = ssub.s32 %s14, %s21
      %p180 = scmp.eq.s32.totalorder %s179, 0
      %s182 = sadd.s32 %s181, 1
      %s183 = scalar_select %p180, %s181, %s182
      %p186 = pneg %p180
      %p187 = scmp.eq.s32.totalorder %s14, 1
      %p188 = por %p186, %p187
      %p189 = scmp.ne.s32.totalorder %s181, %s184
      %p190 = scmp.eq.s32.totalorder %s14, 0
      %p191 = por %p189, %p190
      %p192 = scmp.ne.s32.totalorder %s181, %s184
      %p193 = scmp.eq.s32.totalorder %s19, 1
      %p194 = por %p192, %p193
      %p195 = scmp.ne.s32.totalorder %s184, %s185
      %p196 = scmp.eq.s32.totalorder %s19, 0
      %p197 = por %p195, %p196
      %p198 = scmp.ne.s32.totalorder %s184, %s185
      %p199 = scmp.eq.s32.totalorder %s20, 1
      %p200 = por %p198, %p199
      %p202 = scmp.ne.s32.totalorder %s185, %s201
      %p203 = scmp.eq.s32.totalorder %s20, 0
      %p204 = por %p202, %p203
      %p205 = scmp.le.s32.totalorder 1, %s14
      %p206 = scmp.lt.s32.totalorder %s14, 3
      %p207 = pnand %p205, %p206
      %p208 = pneg %p207
      // Predicated region
      $region9: #{edge_predictor_forward.1} parent=5 // pred_check
        _
      $region10: #{edge_predictor_forward.1} parent=5 // pred_check_branch
        %210 = sbr.rel (%p207) target = $region12
      $region11: #{edge_predictor_forward.1} parent=5 // pred_region
        %s211 = ssub.s32 %s14, 1
        // Predicated region
        $region13: #{edge_predictor_forward.1} parent=11 // pred_check
          %p212 = pneg %p87
        $region14: #{edge_predictor_forward.1} parent=11 // pred_check_branch
          %214 = sbr.rel (%p212) target = $region16
        $region15: #{edge_predictor_forward.1} parent=11 // pred_region
          _
        $region16: #{edge_predictor_forward.1} parent=11 // pred_fallthru
          _
        // Predicated region
        $region17: #{edge_predictor_forward.1} parent=11 // pred_check
          %p215 = pneg %p108
        $region18: #{edge_predictor_forward.1} parent=11 // pred_check_branch
          %217 = sbr.rel (%p215) target = $region20
        $region19: #{edge_predictor_forward.1} parent=11 // pred_region
          _
        $region20: #{edge_predictor_forward.1} parent=11 // pred_fallthru
          _
        // Predicated region
        $region21: #{edge_predictor_forward.1} parent=11 // pred_check
          %p218 = pneg %p129
        $region22: #{edge_predictor_forward.1} parent=11 // pred_check_branch
          %220 = sbr.rel (%p218) target = $region24
        $region23: #{edge_predictor_forward.1} parent=11 // pred_region
          _
        $region24: #{edge_predictor_forward.1} parent=11 // pred_fallthru
          _
        // Predicated region
        $region25: #{edge_predictor_forward.1} parent=11 // pred_check
          %p221 = pneg %p150
        $region26: #{edge_predictor_forward.1} parent=11 // pred_check_branch
          %223 = sbr.rel (%p221) target = $region28
        $region27: #{edge_predictor_forward.1} parent=11 // pred_region
          _
        $region28: #{edge_predictor_forward.1} parent=11 // pred_fallthru
          _
        // Predicated region
        $region29: #{edge_predictor_forward.1} parent=11 // pred_check
          %p224 = pneg %p171
        $region30: #{edge_predictor_forward.1} parent=11 // pred_check_branch
          %226 = sbr.rel (%p224) target = $region32
        $region31: #{edge_predictor_forward.1} parent=11 // pred_region
          _
        $region32: #{edge_predictor_forward.1} parent=11 // pred_fallthru
          _
      $region12: #{edge_predictor_forward.1} parent=5 // pred_fallthru
        _
      %p227 = scmp.lt.s32.totalorder %s14, 2
      // Predicated region
      $region33: #{edge_predictor_forward.1} parent=5 // pred_check
        %p228 = pneg %p227
      $region34: #{edge_predictor_forward.1} parent=5 // pred_check_branch
        %230 = sbr.rel (%p228) target = $region36
      $region35: #{edge_predictor_forward.1} parent=5 // pred_region
        // Predicated region
        $region37: #{edge_predictor_forward.1} parent=35 // pred_check
          %p231 = pneg %p34
        $region38: #{edge_predictor_forward.1} parent=35 // pred_check_branch
          %233 = sbr.rel (%p231) target = $region40
        $region39: #{edge_predictor_forward.1} parent=35 // pred_region
          %s234 = smul.u32 32, %s14
          %p235 = scmp.lt.s32.totalorder %s234, 63
          %s236 = scalar_select %p235, %s234, 63
          %s237 = smul.addr %s236, 8
          %s238 = scalar_lea.vmem %s0, %s237
          %s239 = smul.u32 32, %s14
        $region40: #{edge_predictor_forward.1} parent=35 // pred_fallthru
          _
        // Predicated region
        $region41: #{edge_predictor_forward.1} parent=35 // pred_check
          %p240 = pneg %p60
        $region42: #{edge_predictor_forward.1} parent=35 // pred_check_branch
          %242 = sbr.rel (%p240) target = $region44
        $region43: #{edge_predictor_forward.1} parent=35 // pred_region
          %s243 = sand.u32 %s50, 1
          %s244 = sand.u32 %s50, 1
          %s245 = smul.addr %s244, 768
          %s246 = scalar_lea.vmem [#allocation3], %s245
          %s247 = smul.u32 32, %s14
          %s248 = smul.addr %s247, 8
          %s249 = scalar_lea.vmem %s1, %s248
          // Predicated region
          $region45: #{edge_predictor_forward.1} parent=43 // pred_check
            _
          $region46: #{edge_predictor_forward.1} parent=43 // pred_check_branch
            %251 = sbr.rel (0) target = $region48
          $region47: #{edge_predictor_forward.1} parent=43 // pred_region
            // Predicated region
            $region49: #{edge_predictor_forward.1} parent=47 // pred_check
              _
            $region50: #{edge_predictor_forward.1} parent=47 // pred_check_branch
              %253 = sbr.rel (0) target = $region52
            $region51: #{edge_predictor_forward.1} parent=47 // pred_region
              // Predicated region
              $region64: #{edge_predictor_forward.1} parent=51 // pred_check
                _
              $region65: #{edge_predictor_forward.1} parent=51 // pred_check_branch
                %459 = sbr.rel (0) target = $region67
              $region66: #{edge_predictor_forward.1} parent=51 // pred_region
                loop: start=0, step=1, limit=1
                $region68: #{edge_predictor_forward.1} parent=66 // loop_pre_header
                  _
                $region69: #{edge_predictor_forward.1} parent=66 // loop_header
                  %s461 = sphi 0, %s465
                  %p462 = scmp.ge.s32.totalorder %s461, 1
                  %s466 = sphi %s249, %s249
                  %s467 = sphi %s246, %s246
                $region70: #{edge_predictor_forward.1} parent=66 // loop_header_branch
                  %464 = sbr.rel (%p462) target = $region74
                $region71: #{edge_predictor_forward.1} parent=66 // loop_body
                  %v468 = vld [vmem:[%s466] sm:$0xff]
                  %469 = vst [vmem:[%s467] sm:$0xff] %v468
                  %v470 = vld [vmem:[%s466 + $0x8] sm:$0xff]
                  %471 = vst [vmem:[%s467 + $0x8] sm:$0xff] %v470
                  %v472 = vld [vmem:[%s466 + $0x10] sm:$0xff]
                  %473 = vst [vmem:[%s467 + $0x10] sm:$0xff] %v472
                  %v474 = vld [vmem:[%s466 + $0x18] sm:$0xff]
                  %475 = vst [vmem:[%s467 + $0x18] sm:$0xff] %v474
                  %v476 = vld [vmem:[%s466 + $0x20] sm:$0xff]
                  %477 = vst [vmem:[%s467 + $0x20] sm:$0xff] %v476
                  %v478 = vld [vmem:[%s466 + $0x28] sm:$0xff]
                  %479 = vst [vmem:[%s467 + $0x28] sm:$0xff] %v478
                  %v480 = vld [vmem:[%s466 + $0x30] sm:$0xff]
                  %481 = vst [vmem:[%s467 + $0x30] sm:$0xff] %v480
                  %v482 = vld [vmem:[%s466 + $0x38] sm:$0xff]
                  %483 = vst [vmem:[%s467 + $0x38] sm:$0xff] %v482
                  %v484 = vld [vmem:[%s466 + $0x40] sm:$0xff]
                  %485 = vst [vmem:[%s467 + $0x40] sm:$0xff] %v484
                  %v486 = vld [vmem:[%s466 + $0x48] sm:$0xff]
                  %487 = vst [vmem:[%s467 + $0x48] sm:$0xff] %v486
                  %v488 = vld [vmem:[%s466 + $0x50] sm:$0xff]
                  %489 = vst [vmem:[%s467 + $0x50] sm:$0xff] %v488
                  %v490 = vld [vmem:[%s466 + $0x58] sm:$0xff]
                  %491 = vst [vmem:[%s467 + $0x58] sm:$0xff] %v490
                  %v492 = vld [vmem:[%s466 + $0x60] sm:$0xff]
                  %493 = vst [vmem:[%s467 + $0x60] sm:$0xff] %v492
                  %v494 = vld [vmem:[%s466 + $0x68] sm:$0xff]
                  %495 = vst [vmem:[%s467 + $0x68] sm:$0xff] %v494
                  %v496 = vld [vmem:[%s466 + $0x70] sm:$0xff]
                  %497 = vst [vmem:[%s467 + $0x70] sm:$0xff] %v496
                  %v498 = vld [vmem:[%s466 + $0x78] sm:$0xff]
                  %499 = vst [vmem:[%s467 + $0x78] sm:$0xff] %v498
                  %v500 = vld [vmem:[%s466 + $0x80] sm:$0xff]
                  %501 = vst [vmem:[%s467 + $0x80] sm:$0xff] %v500
                  %v502 = vld [vmem:[%s466 + $0x88] sm:$0xff]
                  %503 = vst [vmem:[%s467 + $0x88] sm:$0xff] %v502
                  %v504 = vld [vmem:[%s466 + $0x90] sm:$0xff]
                  %505 = vst [vmem:[%s467 + $0x90] sm:$0xff] %v504
                  %v506 = vld [vmem:[%s466 + $0x98] sm:$0xff]
                  %507 = vst [vmem:[%s467 + $0x98] sm:$0xff] %v506
                  %v508 = vld [vmem:[%s466 + $0xa0] sm:$0xff]
                  %509 = vst [vmem:[%s467 + $0xa0] sm:$0xff] %v508
                  %v510 = vld [vmem:[%s466 + $0xa8] sm:$0xff]
                  %511 = vst [vmem:[%s467 + $0xa8] sm:$0xff] %v510
                  %v512 = vld [vmem:[%s466 + $0xb0] sm:$0xff]
                  %513 = vst [vmem:[%s467 + $0xb0] sm:$0xff] %v512
                  %v514 = vld [vmem:[%s466 + $0xb8] sm:$0xff]
                  %515 = vst [vmem:[%s467 + $0xb8] sm:$0xff] %v514
                  %v516 = vld [vmem:[%s466 + $0xc0] sm:$0xff]
                  %517 = vst [vmem:[%s467 + $0xc0] sm:$0xff] %v516
                  %v518 = vld [vmem:[%s466 + $0xc8] sm:$0xff]
                  %519 = vst [vmem:[%s467 + $0xc8] sm:$0xff] %v518
                  %v520 = vld [vmem:[%s466 + $0xd0] sm:$0xff]
                  %521 = vst [vmem:[%s467 + $0xd0] sm:$0xff] %v520
                  %v522 = vld [vmem:[%s466 + $0xd8] sm:$0xff]
                  %523 = vst [vmem:[%s467 + $0xd8] sm:$0xff] %v522
                  %v524 = vld [vmem:[%s466 + $0xe0] sm:$0xff]
                  %525 = vst [vmem:[%s467 + $0xe0] sm:$0xff] %v524
                  %v526 = vld [vmem:[%s466 + $0xe8] sm:$0xff]
                  %527 = vst [vmem:[%s467 + $0xe8] sm:$0xff] %v526
                  %v528 = vld [vmem:[%s466 + $0xf0] sm:$0xff]
                  %529 = vst [vmem:[%s467 + $0xf0] sm:$0xff] %v528
                  %v530 = vld [vmem:[%s466 + $0xf8] sm:$0xff]
                  %531 = vst [vmem:[%s467 + $0xf8] sm:$0xff] %v530
                  %v532 = vld [vmem:[%s466 + $0x200] sm:$0xff]
                  %533 = vst [vmem:[%s467 + $0x100] sm:$0xff] %v532
                  %v534 = vld [vmem:[%s466 + $0x208] sm:$0xff]
                  %535 = vst [vmem:[%s467 + $0x108] sm:$0xff] %v534
                  %v536 = vld [vmem:[%s466 + $0x210] sm:$0xff]
                  %537 = vst [vmem:[%s467 + $0x110] sm:$0xff] %v536
                  %v538 = vld [vmem:[%s466 + $0x218] sm:$0xff]
                  %539 = vst [vmem:[%s467 + $0x118] sm:$0xff] %v538
                  %v540 = vld [vmem:[%s466 + $0x220] sm:$0xff]
                  %541 = vst [vmem:[%s467 + $0x120] sm:$0xff] %v540
                  %v542 = vld [vmem:[%s466 + $0x228] sm:$0xff]
                  %543 = vst [vmem:[%s467 + $0x128] sm:$0xff] %v542
                  %v544 = vld [vmem:[%s466 + $0x230] sm:$0xff]
                  %545 = vst [vmem:[%s467 + $0x130] sm:$0xff] %v544
                  %v546 = vld [vmem:[%s466 + $0x238] sm:$0xff]
                  %547 = vst [vmem:[%s467 + $0x138] sm:$0xff] %v546
                  %v548 = vld [vmem:[%s466 + $0x240] sm:$0xff]
                  %549 = vst [vmem:[%s467 + $0x140] sm:$0xff] %v548
                  %v550 = vld [vmem:[%s466 + $0x248] sm:$0xff]
                  %551 = vst [vmem:[%s467 + $0x148] sm:$0xff] %v550
                  %v552 = vld [vmem:[%s466 + $0x250] sm:$0xff]
                  %553 = vst [vmem:[%s467 + $0x150] sm:$0xff] %v552
                  %v554 = vld [vmem:[%s466 + $0x258] sm:$0xff]
                  %555 = vst [vmem:[%s467 + $0x158] sm:$0xff] %v554
                  %v556 = vld [vmem:[%s466 + $0x260] sm:$0xff]
                  %557 = vst [vmem:[%s467 + $0x160] sm:$0xff] %v556
                  %v558 = vld [vmem:[%s466 + $0x268] sm:$0xff]
                  %559 = vst [vmem:[%s467 + $0x168] sm:$0xff] %v558
                  %v560 = vld [vmem:[%s466 + $0x270] sm:$0xff]
                  %561 = vst [vmem:[%s467 + $0x170] sm:$0xff] %v560
                  %v562 = vld [vmem:[%s466 + $0x278] sm:$0xff]
                  %563 = vst [vmem:[%s467 + $0x178] sm:$0xff] %v562
                  %v564 = vld [vmem:[%s466 + $0x280] sm:$0xff]
                  %565 = vst [vmem:[%s467 + $0x180] sm:$0xff] %v564
                  %v566 = vld [vmem:[%s466 + $0x288] sm:$0xff]
                  %567 = vst [vmem:[%s467 + $0x188] sm:$0xff] %v566
                  %v568 = vld [vmem:[%s466 + $0x290] sm:$0xff]
                  %569 = vst [vmem:[%s467 + $0x190] sm:$0xff] %v568
                  %v570 = vld [vmem:[%s466 + $0x298] sm:$0xff]
                  %571 = vst [vmem:[%s467 + $0x198] sm:$0xff] %v570
                  %v572 = vld [vmem:[%s466 + $0x2a0] sm:$0xff]
                  %573 = vst [vmem:[%s467 + $0x1a0] sm:$0xff] %v572
                  %v574 = vld [vmem:[%s466 + $0x2a8] sm:$0xff]
                  %575 = vst [vmem:[%s467 + $0x1a8] sm:$0xff] %v574
                  %v576 = vld [vmem:[%s466 + $0x2b0] sm:$0xff]
                  %577 = vst [vmem:[%s467 + $0x1b0] sm:$0xff] %v576
                  %v578 = vld [vmem:[%s466 + $0x2b8] sm:$0xff]
                  %579 = vst [vmem:[%s467 + $0x1b8] sm:$0xff] %v578
                  %v580 = vld [vmem:[%s466 + $0x2c0] sm:$0xff]
                  %581 = vst [vmem:[%s467 + $0x1c0] sm:$0xff] %v580
                  %v582 = vld [vmem:[%s466 + $0x2c8] sm:$0xff]
                  %583 = vst [vmem:[%s467 + $0x1c8] sm:$0xff] %v582
                  %v584 = vld [vmem:[%s466 + $0x2d0] sm:$0xff]
                  %585 = vst [vmem:[%s467 + $0x1d0] sm:$0xff] %v584
                  %v586 = vld [vmem:[%s466 + $0x2d8] sm:$0xff]
                  %587 = vst [vmem:[%s467 + $0x1d8] sm:$0xff] %v586
                  %v588 = vld [vmem:[%s466 + $0x2e0] sm:$0xff]
                  %589 = vst [vmem:[%s467 + $0x1e0] sm:$0xff] %v588
                  %v590 = vld [vmem:[%s466 + $0x2e8] sm:$0xff]
                  %591 = vst [vmem:[%s467 + $0x1e8] sm:$0xff] %v590
                  %v592 = vld [vmem:[%s466 + $0x2f0] sm:$0xff]
                  %593 = vst [vmem:[%s467 + $0x1f0] sm:$0xff] %v592
                  %v594 = vld [vmem:[%s466 + $0x2f8] sm:$0xff]
                  %595 = vst [vmem:[%s467 + $0x1f8] sm:$0xff] %v594
                  %v596 = vld [vmem:[%s466 + $0x400] sm:$0xff]
                  %597 = vst [vmem:[%s467 + $0x200] sm:$0xff] %v596
                  %v598 = vld [vmem:[%s466 + $0x408] sm:$0xff]
                  %599 = vst [vmem:[%s467 + $0x208] sm:$0xff] %v598
                  %v600 = vld [vmem:[%s466 + $0x410] sm:$0xff]
                  %601 = vst [vmem:[%s467 + $0x210] sm:$0xff] %v600
                  %v602 = vld [vmem:[%s466 + $0x418] sm:$0xff]
                  %603 = vst [vmem:[%s467 + $0x218] sm:$0xff] %v602
                  %v604 = vld [vmem:[%s466 + $0x420] sm:$0xff]
                  %605 = vst [vmem:[%s467 + $0x220] sm:$0xff] %v604
                  %v606 = vld [vmem:[%s466 + $0x428] sm:$0xff]
                  %607 = vst [vmem:[%s467 + $0x228] sm:$0xff] %v606
                  %v608 = vld [vmem:[%s466 + $0x430] sm:$0xff]
                  %609 = vst [vmem:[%s467 + $0x230] sm:$0xff] %v608
                  %v610 = vld [vmem:[%s466 + $0x438] sm:$0xff]
                  %611 = vst [vmem:[%s467 + $0x238] sm:$0xff] %v610
                  %v612 = vld [vmem:[%s466 + $0x440] sm:$0xff]
                  %613 = vst [vmem:[%s467 + $0x240] sm:$0xff] %v612
                  %v614 = vld [vmem:[%s466 + $0x448] sm:$0xff]
                  %615 = vst [vmem:[%s467 + $0x248] sm:$0xff] %v614
                  %v616 = vld [vmem:[%s466 + $0x450] sm:$0xff]
                  %617 = vst [vmem:[%s467 + $0x250] sm:$0xff] %v616
                  %v618 = vld [vmem:[%s466 + $0x458] sm:$0xff]
                  %619 = vst [vmem:[%s467 + $0x258] sm:$0xff] %v618
                  %v620 = vld [vmem:[%s466 + $0x460] sm:$0xff]
                  %621 = vst [vmem:[%s467 + $0x260] sm:$0xff] %v620
                  %v622 = vld [vmem:[%s466 + $0x468] sm:$0xff]
                  %623 = vst [vmem:[%s467 + $0x268] sm:$0xff] %v622
                  %v624 = vld [vmem:[%s466 + $0x470] sm:$0xff]
                  %625 = vst [vmem:[%s467 + $0x270] sm:$0xff] %v624
                  %v626 = vld [vmem:[%s466 + $0x478] sm:$0xff]
                  %627 = vst [vmem:[%s467 + $0x278] sm:$0xff] %v626
                  %v628 = vld [vmem:[%s466 + $0x480] sm:$0xff]
                  %629 = vst [vmem:[%s467 + $0x280] sm:$0xff] %v628
                  %v630 = vld [vmem:[%s466 + $0x488] sm:$0xff]
                  %631 = vst [vmem:[%s467 + $0x288] sm:$0xff] %v630
                  %v632 = vld [vmem:[%s466 + $0x490] sm:$0xff]
                  %633 = vst [vmem:[%s467 + $0x290] sm:$0xff] %v632
                  %v634 = vld [vmem:[%s466 + $0x498] sm:$0xff]
                  %635 = vst [vmem:[%s467 + $0x298] sm:$0xff] %v634
                  %v636 = vld [vmem:[%s466 + $0x4a0] sm:$0xff]
                  %637 = vst [vmem:[%s467 + $0x2a0] sm:$0xff] %v636
                  %v638 = vld [vmem:[%s466 + $0x4a8] sm:$0xff]
                  %639 = vst [vmem:[%s467 + $0x2a8] sm:$0xff] %v638
                  %v640 = vld [vmem:[%s466 + $0x4b0] sm:$0xff]
                  %641 = vst [vmem:[%s467 + $0x2b0] sm:$0xff] %v640
                  %v642 = vld [vmem:[%s466 + $0x4b8] sm:$0xff]
                  %643 = vst [vmem:[%s467 + $0x2b8] sm:$0xff] %v642
                  %v644 = vld [vmem:[%s466 + $0x4c0] sm:$0xff]
                  %645 = vst [vmem:[%s467 + $0x2c0] sm:$0xff] %v644
                  %v646 = vld [vmem:[%s466 + $0x4c8] sm:$0xff]
                  %647 = vst [vmem:[%s467 + $0x2c8] sm:$0xff] %v646
                  %v648 = vld [vmem:[%s466 + $0x4d0] sm:$0xff]
                  %649 = vst [vmem:[%s467 + $0x2d0] sm:$0xff] %v648
                  %v650 = vld [vmem:[%s466 + $0x4d8] sm:$0xff]
                  %651 = vst [vmem:[%s467 + $0x2d8] sm:$0xff] %v650
                  %v652 = vld [vmem:[%s466 + $0x4e0] sm:$0xff]
                  %653 = vst [vmem:[%s467 + $0x2e0] sm:$0xff] %v652
                  %v654 = vld [vmem:[%s466 + $0x4e8] sm:$0xff]
                  %655 = vst [vmem:[%s467 + $0x2e8] sm:$0xff] %v654
                  %v656 = vld [vmem:[%s466 + $0x4f0] sm:$0xff]
                  %657 = vst [vmem:[%s467 + $0x2f0] sm:$0xff] %v656
                  %v658 = vld [vmem:[%s466 + $0x4f8] sm:$0xff]
                  %659 = vst [vmem:[%s467 + $0x2f8] sm:$0xff] %v658
                $region72: #{edge_predictor_forward.1} parent=66 // loop_footer
                  %s465 = sadd.s32 1, %s461
                $region73: #{edge_predictor_forward.1} parent=66 // loop_footer_branch
                  %460 = sbr.rel target = $region69
                $region74: #{edge_predictor_forward.1} parent=66 // loop_exit
                  _
              $region67: #{edge_predictor_forward.1} parent=51 // pred_fallthru
                _
              // Predicated region
              $region75: #{edge_predictor_forward.1} parent=51 // pred_check
                _
              $region76: #{edge_predictor_forward.1} parent=51 // pred_check_branch
                %661 = sbr.rel target = $region78
              $region77: #{edge_predictor_forward.1} parent=51 // pred_region
                _
              $region78: #{edge_predictor_forward.1} parent=51 // pred_fallthru
                _
            $region52: #{edge_predictor_forward.1} parent=47 // pred_fallthru
              _
            // Predicated region
            $region53: #{edge_predictor_forward.1} parent=47 // pred_check
              _
            $region54: #{edge_predictor_forward.1} parent=47 // pred_check_branch
              %255 = sbr.rel target = $region56
            $region55: #{edge_predictor_forward.1} parent=47 // pred_region
              %s257 = ssub.s32 256, 1
              loop: start=0, step=1, limit=1
              $region57: #{edge_predictor_forward.1} parent=55 // loop_pre_header
                _
              $region58: #{edge_predictor_forward.1} parent=55 // loop_header
                %s259 = sphi 0, %s263
                %p260 = scmp.ge.s32.totalorder %s259, 1
                %s264 = sphi %s249, %s249
                %s265 = sphi %s246, %s246
              $region59: #{edge_predictor_forward.1} parent=55 // loop_header_branch
                %262 = sbr.rel (%p260) target = $region63
              $region60: #{edge_predictor_forward.1} parent=55 // loop_body
                %v266 = vld [vmem:[%s264] sm:%s257]
                %267 = vst [vmem:[%s265] sm:%s257] %v266
                %v268 = vld [vmem:[%s264 + $0x8] sm:%s257]
                %269 = vst [vmem:[%s265 + $0x8] sm:%s257] %v268
                %v270 = vld [vmem:[%s264 + $0x10] sm:%s257]
                %271 = vst [vmem:[%s265 + $0x10] sm:%s257] %v270
                %v272 = vld [vmem:[%s264 + $0x18] sm:%s257]
                %273 = vst [vmem:[%s265 + $0x18] sm:%s257] %v272
                %v274 = vld [vmem:[%s264 + $0x20] sm:%s257]
                %275 = vst [vmem:[%s265 + $0x20] sm:%s257] %v274
                %v276 = vld [vmem:[%s264 + $0x28] sm:%s257]
                %277 = vst [vmem:[%s265 + $0x28] sm:%s257] %v276
                %v278 = vld [vmem:[%s264 + $0x30] sm:%s257]
                %279 = vst [vmem:[%s265 + $0x30] sm:%s257] %v278
                %v280 = vld [vmem:[%s264 + $0x38] sm:%s257]
                %281 = vst [vmem:[%s265 + $0x38] sm:%s257] %v280
                %v282 = vld [vmem:[%s264 + $0x40] sm:%s257]
                %283 = vst [vmem:[%s265 + $0x40] sm:%s257] %v282
                %v284 = vld [vmem:[%s264 + $0x48] sm:%s257]
                %285 = vst [vmem:[%s265 + $0x48] sm:%s257] %v284
                %v286 = vld [vmem:[%s264 + $0x50] sm:%s257]
                %287 = vst [vmem:[%s265 + $0x50] sm:%s257] %v286
                %v288 = vld [vmem:[%s264 + $0x58] sm:%s257]
                %289 = vst [vmem:[%s265 + $0x58] sm:%s257] %v288
                %v290 = vld [vmem:[%s264 + $0x60] sm:%s257]
                %291 = vst [vmem:[%s265 + $0x60] sm:%s257] %v290
                %v292 = vld [vmem:[%s264 + $0x68] sm:%s257]
                %293 = vst [vmem:[%s265 + $0x68] sm:%s257] %v292
                %v294 = vld [vmem:[%s264 + $0x70] sm:%s257]
                %295 = vst [vmem:[%s265 + $0x70] sm:%s257] %v294
                %v296 = vld [vmem:[%s264 + $0x78] sm:%s257]
                %297 = vst [vmem:[%s265 + $0x78] sm:%s257] %v296
                %v298 = vld [vmem:[%s264 + $0x80] sm:%s257]
                %299 = vst [vmem:[%s265 + $0x80] sm:%s257] %v298
                %v300 = vld [vmem:[%s264 + $0x88] sm:%s257]
                %301 = vst [vmem:[%s265 + $0x88] sm:%s257] %v300
                %v302 = vld [vmem:[%s264 + $0x90] sm:%s257]
                %303 = vst [vmem:[%s265 + $0x90] sm:%s257] %v302
                %v304 = vld [vmem:[%s264 + $0x98] sm:%s257]
                %305 = vst [vmem:[%s265 + $0x98] sm:%s257] %v304
                %v306 = vld [vmem:[%s264 + $0xa0] sm:%s257]
                %307 = vst [vmem:[%s265 + $0xa0] sm:%s257] %v306
                %v308 = vld [vmem:[%s264 + $0xa8] sm:%s257]
                %309 = vst [vmem:[%s265 + $0xa8] sm:%s257] %v308
                %v310 = vld [vmem:[%s264 + $0xb0] sm:%s257]
                %311 = vst [vmem:[%s265 + $0xb0] sm:%s257] %v310
                %v312 = vld [vmem:[%s264 + $0xb8] sm:%s257]
                %313 = vst [vmem:[%s265 + $0xb8] sm:%s257] %v312
                %v314 = vld [vmem:[%s264 + $0xc0] sm:%s257]
                %315 = vst [vmem:[%s265 + $0xc0] sm:%s257] %v314
                %v316 = vld [vmem:[%s264 + $0xc8] sm:%s257]
                %317 = vst [vmem:[%s265 + $0xc8] sm:%s257] %v316
                %v318 = vld [vmem:[%s264 + $0xd0] sm:%s257]
                %319 = vst [vmem:[%s265 + $0xd0] sm:%s257] %v318
                %v320 = vld [vmem:[%s264 + $0xd8] sm:%s257]
                %321 = vst [vmem:[%s265 + $0xd8] sm:%s257] %v320
                %v322 = vld [vmem:[%s264 + $0xe0] sm:%s257]
                %323 = vst [vmem:[%s265 + $0xe0] sm:%s257] %v322
                %v324 = vld [vmem:[%s264 + $0xe8] sm:%s257]
                %325 = vst [vmem:[%s265 + $0xe8] sm:%s257] %v324
                %v326 = vld [vmem:[%s264 + $0xf0] sm:%s257]
                %327 = vst [vmem:[%s265 + $0xf0] sm:%s257] %v326
                %v328 = vld [vmem:[%s264 + $0xf8] sm:%s257]
                %329 = vst [vmem:[%s265 + $0xf8] sm:%s257] %v328
                %v330 = vld [vmem:[%s264 + $0x200] sm:%s257]
                %331 = vst [vmem:[%s265 + $0x100] sm:%s257] %v330
                %v332 = vld [vmem:[%s264 + $0x208] sm:%s257]
                %333 = vst [vmem:[%s265 + $0x108] sm:%s257] %v332
                %v334 = vld [vmem:[%s264 + $0x210] sm:%s257]
                %335 = vst [vmem:[%s265 + $0x110] sm:%s257] %v334
                %v336 = vld [vmem:[%s264 + $0x218] sm:%s257]
                %337 = vst [vmem:[%s265 + $0x118] sm:%s257] %v336
                %v338 = vld [vmem:[%s264 + $0x220] sm:%s257]
                %339 = vst [vmem:[%s265 + $0x120] sm:%s257] %v338
                %v340 = vld [vmem:[%s264 + $0x228] sm:%s257]
                %341 = vst [vmem:[%s265 + $0x128] sm:%s257] %v340
                %v342 = vld [vmem:[%s264 + $0x230] sm:%s257]
                %343 = vst [vmem:[%s265 + $0x130] sm:%s257] %v342
                %v344 = vld [vmem:[%s264 + $0x238] sm:%s257]
                %345 = vst [vmem:[%s265 + $0x138] sm:%s257] %v344
                %v346 = vld [vmem:[%s264 + $0x240] sm:%s257]
                %347 = vst [vmem:[%s265 + $0x140] sm:%s257] %v346
                %v348 = vld [vmem:[%s264 + $0x248] sm:%s257]
                %349 = vst [vmem:[%s265 + $0x148] sm:%s257] %v348
                %v350 = vld [vmem:[%s264 + $0x250] sm:%s257]
                %351 = vst [vmem:[%s265 + $0x150] sm:%s257] %v350
                %v352 = vld [vmem:[%s264 + $0x258] sm:%s257]
                %353 = vst [vmem:[%s265 + $0x158] sm:%s257] %v352
                %v354 = vld [vmem:[%s264 + $0x260] sm:%s257]
                %355 = vst [vmem:[%s265 + $0x160] sm:%s257] %v354
                %v356 = vld [vmem:[%s264 + $0x268] sm:%s257]
                %357 = vst [vmem:[%s265 + $0x168] sm:%s257] %v356
                %v358 = vld [vmem:[%s264 + $0x270] sm:%s257]
                %359 = vst [vmem:[%s265 + $0x170] sm:%s257] %v358
                %v360 = vld [vmem:[%s264 + $0x278] sm:%s257]
                %361 = vst [vmem:[%s265 + $0x178] sm:%s257] %v360
                %v362 = vld [vmem:[%s264 + $0x280] sm:%s257]
                %363 = vst [vmem:[%s265 + $0x180] sm:%s257] %v362
                %v364 = vld [vmem:[%s264 + $0x288] sm:%s257]
                %365 = vst [vmem:[%s265 + $0x188] sm:%s257] %v364
                %v366 = vld [vmem:[%s264 + $0x290] sm:%s257]
                %367 = vst [vmem:[%s265 + $0x190] sm:%s257] %v366
                %v368 = vld [vmem:[%s264 + $0x298] sm:%s257]
                %369 = vst [vmem:[%s265 + $0x198] sm:%s257] %v368
                %v370 = vld [vmem:[%s264 + $0x2a0] sm:%s257]
                %371 = vst [vmem:[%s265 + $0x1a0] sm:%s257] %v370
                %v372 = vld [vmem:[%s264 + $0x2a8] sm:%s257]
                %373 = vst [vmem:[%s265 + $0x1a8] sm:%s257] %v372
                %v374 = vld [vmem:[%s264 + $0x2b0] sm:%s257]
                %375 = vst [vmem:[%s265 + $0x1b0] sm:%s257] %v374
                %v376 = vld [vmem:[%s264 + $0x2b8] sm:%s257]
                %377 = vst [vmem:[%s265 + $0x1b8] sm:%s257] %v376
                %v378 = vld [vmem:[%s264 + $0x2c0] sm:%s257]
                %379 = vst [vmem:[%s265 + $0x1c0] sm:%s257] %v378
                %v380 = vld [vmem:[%s264 + $0x2c8] sm:%s257]
                %381 = vst [vmem:[%s265 + $0x1c8] sm:%s257] %v380
                %v382 = vld [vmem:[%s264 + $0x2d0] sm:%s257]
                %383 = vst [vmem:[%s265 + $0x1d0] sm:%s257] %v382
                %v384 = vld [vmem:[%s264 + $0x2d8] sm:%s257]
                %385 = vst [vmem:[%s265 + $0x1d8] sm:%s257] %v384
                %v386 = vld [vmem:[%s264 + $0x2e0] sm:%s257]
                %387 = vst [vmem:[%s265 + $0x1e0] sm:%s257] %v386
                %v388 = vld [vmem:[%s264 + $0x2e8] sm:%s257]
                %389 = vst [vmem:[%s265 + $0x1e8] sm:%s257] %v388
                %v390 = vld [vmem:[%s264 + $0x2f0] sm:%s257]
                %391 = vst [vmem:[%s265 + $0x1f0] sm:%s257] %v390
                %v392 = vld [vmem:[%s264 + $0x2f8] sm:%s257]
                %393 = vst [vmem:[%s265 + $0x1f8] sm:%s257] %v392
                %v394 = vld [vmem:[%s264 + $0x400] sm:%s257]
                %395 = vst [vmem:[%s265 + $0x200] sm:%s257] %v394
                %v396 = vld [vmem:[%s264 + $0x408] sm:%s257]
                %397 = vst [vmem:[%s265 + $0x208] sm:%s257] %v396
                %v398 = vld [vmem:[%s264 + $0x410] sm:%s257]
                %399 = vst [vmem:[%s265 + $0x210] sm:%s257] %v398
                %v400 = vld [vmem:[%s264 + $0x418] sm:%s257]
                %401 = vst [vmem:[%s265 + $0x218] sm:%s257] %v400
                %v402 = vld [vmem:[%s264 + $0x420] sm:%s257]
                %403 = vst [vmem:[%s265 + $0x220] sm:%s257] %v402
                %v404 = vld [vmem:[%s264 + $0x428] sm:%s257]
                %405 = vst [vmem:[%s265 + $0x228] sm:%s257] %v404
                %v406 = vld [vmem:[%s264 + $0x430] sm:%s257]
                %407 = vst [vmem:[%s265 + $0x230] sm:%s257] %v406
                %v408 = vld [vmem:[%s264 + $0x438] sm:%s257]
                %409 = vst [vmem:[%s265 + $0x238] sm:%s257] %v408
                %v410 = vld [vmem:[%s264 + $0x440] sm:%s257]
                %411 = vst [vmem:[%s265 + $0x240] sm:%s257] %v410
                %v412 = vld [vmem:[%s264 + $0x448] sm:%s257]
                %413 = vst [vmem:[%s265 + $0x248] sm:%s257] %v412
                %v414 = vld [vmem:[%s264 + $0x450] sm:%s257]
                %415 = vst [vmem:[%s265 + $0x250] sm:%s257] %v414
                %v416 = vld [vmem:[%s264 + $0x458] sm:%s257]
                %417 = vst [vmem:[%s265 + $0x258] sm:%s257] %v416
                %v418 = vld [vmem:[%s264 + $0x460] sm:%s257]
                %419 = vst [vmem:[%s265 + $0x260] sm:%s257] %v418
                %v420 = vld [vmem:[%s264 + $0x468] sm:%s257]
                %421 = vst [vmem:[%s265 + $0x268] sm:%s257] %v420
                %v422 = vld [vmem:[%s264 + $0x470] sm:%s257]
                %423 = vst [vmem:[%s265 + $0x270] sm:%s257] %v422
                %v424 = vld [vmem:[%s264 + $0x478] sm:%s257]
                %425 = vst [vmem:[%s265 + $0x278] sm:%s257] %v424
                %v426 = vld [vmem:[%s264 + $0x480] sm:%s257]
                %427 = vst [vmem:[%s265 + $0x280] sm:%s257] %v426
                %v428 = vld [vmem:[%s264 + $0x488] sm:%s257]
                %429 = vst [vmem:[%s265 + $0x288] sm:%s257] %v428
                %v430 = vld [vmem:[%s264 + $0x490] sm:%s257]
                %431 = vst [vmem:[%s265 + $0x290] sm:%s257] %v430
                %v432 = vld [vmem:[%s264 + $0x498] sm:%s257]
                %433 = vst [vmem:[%s265 + $0x298] sm:%s257] %v432
                %v434 = vld [vmem:[%s264 + $0x4a0] sm:%s257]
                %435 = vst [vmem:[%s265 + $0x2a0] sm:%s257] %v434
                %v436 = vld [vmem:[%s264 + $0x4a8] sm:%s257]
                %437 = vst [vmem:[%s265 + $0x2a8] sm:%s257] %v436
                %v438 = vld [vmem:[%s264 + $0x4b0] sm:%s257]
                %439 = vst [vmem:[%s265 + $0x2b0] sm:%s257] %v438
                %v440 = vld [vmem:[%s264 + $0x4b8] sm:%s257]
                %441 = vst [vmem:[%s265 + $0x2b8] sm:%s257] %v440
                %v442 = vld [vmem:[%s264 + $0x4c0] sm:%s257]
                %443 = vst [vmem:[%s265 + $0x2c0] sm:%s257] %v442
                %v444 = vld [vmem:[%s264 + $0x4c8] sm:%s257]
                %445 = vst [vmem:[%s265 + $0x2c8] sm:%s257] %v444
                %v446 = vld [vmem:[%s264 + $0x4d0] sm:%s257]
                %447 = vst [vmem:[%s265 + $0x2d0] sm:%s257] %v446
                %v448 = vld [vmem:[%s264 + $0x4d8] sm:%s257]
                %449 = vst [vmem:[%s265 + $0x2d8] sm:%s257] %v448
                %v450 = vld [vmem:[%s264 + $0x4e0] sm:%s257]
                %451 = vst [vmem:[%s265 + $0x2e0] sm:%s257] %v450
                %v452 = vld [vmem:[%s264 + $0x4e8] sm:%s257]
                %453 = vst [vmem:[%s265 + $0x2e8] sm:%s257] %v452
                %v454 = vld [vmem:[%s264 + $0x4f0] sm:%s257]
                %455 = vst [vmem:[%s265 + $0x2f0] sm:%s257] %v454
                %v456 = vld [vmem:[%s264 + $0x4f8] sm:%s257]
                %457 = vst [vmem:[%s265 + $0x2f8] sm:%s257] %v456
              $region61: #{edge_predictor_forward.1} parent=55 // loop_footer
                %s263 = sadd.s32 1, %s259
              $region62: #{edge_predictor_forward.1} parent=55 // loop_footer_branch
                %258 = sbr.rel target = $region58
              $region63: #{edge_predictor_forward.1} parent=55 // loop_exit
                _
            $region56: #{edge_predictor_forward.1} parent=47 // pred_fallthru
              _
          $region48: #{edge_predictor_forward.1} parent=43 // pred_fallthru
            _
          %662 = vnop
        $region44: #{edge_predictor_forward.1} parent=35 // pred_fallthru
          _
      $region36: #{edge_predictor_forward.1} parent=5 // pred_fallthru
        _
      %p663 = scmp.le.s32.totalorder 1, %s14
      %p664 = scmp.lt.s32.totalorder %s14, 3
      %p665 = pnand %p663, %p664
      %p666 = pneg %p665
      // Predicated region
      $region79: #{edge_predictor_forward.1} parent=5 // pred_check
        _
      $region80: #{edge_predictor_forward.1} parent=5 // pred_check_branch
        %668 = sbr.rel (%p665) target = $region82
      $region81: #{edge_predictor_forward.1} parent=5 // pred_region
        %s669 = ssub.s32 %s14, 1
        %s670 = sand.u32 %s53, 1
        %s671 = sand.u32 %s53, 1
        %s672 = smul.addr %s671, 768
        %s673 = scalar_lea.vmem [#allocation3], %s672
        // Predicated region
        $region83: #{edge_predictor_forward.1} parent=81 // pred_check
          %p674 = pneg %p66
        $region84: #{edge_predictor_forward.1} parent=81 // pred_check_branch
          %676 = sbr.rel (%p674) target = $region86
        $region85: #{edge_predictor_forward.1} parent=81 // pred_region
          _
        $region86: #{edge_predictor_forward.1} parent=81 // pred_fallthru
          _
        %s677 = smul.u32 32, %s19
        %p678 = scmp.lt.s32.totalorder %s677, 63
        %s679 = scalar_select %p678, %s677, 63
        %s680 = smul.addr %s679, 8
        %s681 = scalar_lea.vmem %s0, %s680
        %p682 = pneg %p40
        %p683 = pneg %p37
        %s684 = sand.u32 %s53, 1
        %s685 = sand.u32 %s53, 1
        %s686 = smul.addr %s685, 768
        %s687 = scalar_lea.vmem [#allocation3], %s686
        %p688 = pneg %p66
        %p689 = pneg %p63
        %p690 = pneg %p87
        %p691 = pneg %p84
        %p692 = pneg %p108
        %p693 = pneg %p105
        %p694 = pneg %p129
        %p695 = pneg %p126
        %p696 = pneg %p150
        %p697 = pneg %p147
        %p698 = pneg %p171
        %p699 = pneg %p168
        %p700 = pneg %p197
        %p701 = pneg %p194
        %s702 = smul.u32 6, %s19
        %p703 = scmp.lt.s32.totalorder %s702, 11
        %s704 = scalar_select %p703, %s702, 11
        %s705 = smul.addr %s704, 8
        %s706 = scalar_lea.vmem %s7, %s705
        %s707 = smul.u32 32, %s19
        %p708 = scmp.lt.s32.totalorder %s707, 63
        %s709 = scalar_select %p708, %s707, 63
        %s710 = smul.addr %s709, 8
        %s711 = scalar_lea.vmem %s0, %s710
        %s712 = smul.u32 32, %s19
        %s713 = smul.u32 32, %s19
        %s714 = smul.u32 6, %s19
        %p715 = scmp.lt.s32.totalorder %s714, 11
        %s716 = scalar_select %p715, %s714, 11
        %s717 = smul.addr %s716, 8
        %s718 = scalar_lea.vmem %s7, %s717
        %s719 = smul.u32 6, %s19
        %v720 = vld [vmem:[%s711] sm:$0xff]
        %v721 = vld [vmem:[%s711 + $0x8] sm:$0xff]
        %v722 = vld [vmem:[%s711 + $0x10] sm:$0xff]
        %v723 = vld [vmem:[%s711 + $0x18] sm:$0xff]
        %v724 = vld [vmem:[%s711 + $0x20] sm:$0xff]
        %v725 = vld [vmem:[%s711 + $0x28] sm:$0xff]
        %v726 = vld [vmem:[%s711 + $0x30] sm:$0xff]
        %v727 = vld [vmem:[%s711 + $0x38] sm:$0xff]
        %v728 = vld [vmem:[%s711 + $0x40] sm:$0xff]
        %v729 = vld [vmem:[%s711 + $0x48] sm:$0xff]
        %v730 = vld [vmem:[%s711 + $0x50] sm:$0xff]
        %v731 = vld [vmem:[%s711 + $0x58] sm:$0xff]
        %v732 = vld [vmem:[%s711 + $0x60] sm:$0xff]
        %v733 = vld [vmem:[%s711 + $0x68] sm:$0xff]
        %v734 = vld [vmem:[%s711 + $0x70] sm:$0xff]
        %v735 = vld [vmem:[%s711 + $0x78] sm:$0xff]
        %v736 = vld [vmem:[%s711 + $0x80] sm:$0xff]
        %v737 = vld [vmem:[%s711 + $0x88] sm:$0xff]
        %v738 = vld [vmem:[%s711 + $0x90] sm:$0xff]
        %v739 = vld [vmem:[%s711 + $0x98] sm:$0xff]
        %v740 = vld [vmem:[%s711 + $0xa0] sm:$0xff]
        %v741 = vld [vmem:[%s711 + $0xa8] sm:$0xff]
        %v742 = vld [vmem:[%s711 + $0xb0] sm:$0xff]
        %v743 = vld [vmem:[%s711 + $0xb8] sm:$0xff]
        %v744 = vld [vmem:[%s711 + $0xc0] sm:$0xff]
        %v745 = vld [vmem:[%s711 + $0xc8] sm:$0xff]
        %v746 = vld [vmem:[%s711 + $0xd0] sm:$0xff]
        %v747 = vld [vmem:[%s711 + $0xd8] sm:$0xff]
        %v748 = vld [vmem:[%s711 + $0xe0] sm:$0xff]
        %v749 = vld [vmem:[%s711 + $0xe8] sm:$0xff]
        %v750 = vld [vmem:[%s711 + $0xf0] sm:$0xff]
        %v751 = vld [vmem:[%s711 + $0xf8] sm:$0xff]
        %v752 = vld [vmem:[%s2] sm:$0xff]
        %v753 = vld [vmem:[%s2 + $0x8] sm:$0xff]
        %v754 = vld [vmem:[%s2 + $0x10] sm:$0xff]
        %v755 = vld [vmem:[%s2 + $0x18] sm:$0xff]
        %vm756 = vcmask 261120
        %v758 = vsel %vm756, %v720, 0
        %v761 = vsel %vm756, %v721, 0
        %v764 = vsel %vm756, %v722, 0
        %v767 = vsel %vm756, %v723, 0
        %v770 = vsel %vm756, %v724, 0
        %v773 = vsel %vm756, %v725, 0
        %v776 = vsel %vm756, %v726, 0
        %v779 = vsel %vm756, %v727, 0
        %v782 = vsel %vm756, %v728, 0
        %v785 = vsel %vm756, %v729, 0
        %v788 = vsel %vm756, %v730, 0
        %v791 = vsel %vm756, %v731, 0
        %v794 = vsel %vm756, %v732, 0
        %v797 = vsel %vm756, %v733, 0
        %v800 = vsel %vm756, %v734, 0
        %v803 = vsel %vm756, %v735, 0
        %v806 = vsel %vm756, %v736, 0
        %v809 = vsel %vm756, %v737, 0
        %v812 = vsel %vm756, %v738, 0
        %v815 = vsel %vm756, %v739, 0
        %v818 = vsel %vm756, %v740, 0
        %v821 = vsel %vm756, %v741, 0
        %v824 = vsel %vm756, %v742, 0
        %v827 = vsel %vm756, %v743, 0
        %v830 = vsel %vm756, %v744, 0
        %v833 = vsel %vm756, %v745, 0
        %v836 = vsel %vm756, %v746, 0
        %v839 = vsel %vm756, %v747, 0
        %v842 = vsel %vm756, %v748, 0
        %v845 = vsel %vm756, %v749, 0
        %v848 = vsel %vm756, %v750, 0
        %v851 = vsel %vm756, %v751, 0
        %853 = vmatpush.msra.mxu0 0.0
        %854 = vmatpush.msra.mxu0 0.0
        %855 = vmatpush.msra.mxu0 0.0
        %856 = vmatpush.msra.mxu0 0.0
        %857 = vmatpush.msra.mxu0 0.0
        %858 = vmatpush.msra.mxu0 0.0
        %859 = vmatpush.msra.mxu0 0.0
        %860 = vmatpush.msra.mxu0 0.0
        %861 = vmatpush.msra.mxu0 0.0
        %862 = vmatpush.msra.mxu0 0.0
        %863 = vmatpush.msra.mxu0 0.0
        %864 = vmatpush.msra.mxu0 0.0
        %865 = vmatpush.msra.mxu0 %v755
        %866 = vmatpush.msra.mxu0 %v754
        %867 = vmatpush.msra.mxu0 %v753
        %868 = vmatpush.msra.mxu0 %v752
        %869 = vmatmul.f32.gmra.mxu0 %v758
        %v870 = vpop.f32.mrf.mxu0
        %v871 = vadd.f32 0.0, %v870
        %872 = vmatmul.f32.gmra.mxu0 %v761
        %v873 = vpop.f32.mrf.mxu0
        %v874 = vadd.f32 0.0, %v873
        %875 = vmatmul.f32.gmra.mxu0 %v764
        %v876 = vpop.f32.mrf.mxu0
        %v877 = vadd.f32 0.0, %v876
        %878 = vmatmul.f32.gmra.mxu0 %v767
        %v879 = vpop.f32.mrf.mxu0
        %v880 = vadd.f32 0.0, %v879
        %881 = vmatmul.f32.gmra.mxu0 %v770
        %v882 = vpop.f32.mrf.mxu0
        %v883 = vadd.f32 0.0, %v882
        %884 = vmatmul.f32.gmra.mxu0 %v773
        %v885 = vpop.f32.mrf.mxu0
        %v886 = vadd.f32 0.0, %v885
        %887 = vmatmul.f32.gmra.mxu0 %v776
        %v888 = vpop.f32.mrf.mxu0
        %v889 = vadd.f32 0.0, %v888
        %890 = vmatmul.f32.gmra.mxu0 %v779
        %v891 = vpop.f32.mrf.mxu0
        %v892 = vadd.f32 0.0, %v891
        %893 = vmatmul.f32.gmra.mxu0 %v782
        %v894 = vpop.f32.mrf.mxu0
        %v895 = vadd.f32 0.0, %v894
        %896 = vmatmul.f32.gmra.mxu0 %v785
        %v897 = vpop.f32.mrf.mxu0
        %v898 = vadd.f32 0.0, %v897
        %899 = vmatmul.f32.gmra.mxu0 %v788
        %v900 = vpop.f32.mrf.mxu0
        %v901 = vadd.f32 0.0, %v900
        %902 = vmatmul.f32.gmra.mxu0 %v791
        %v903 = vpop.f32.mrf.mxu0
        %v904 = vadd.f32 0.0, %v903
        %905 = vmatmul.f32.gmra.mxu0 %v794
        %v906 = vpop.f32.mrf.mxu0
        %v907 = vadd.f32 0.0, %v906
        %908 = vmatmul.f32.gmra.mxu0 %v797
        %v909 = vpop.f32.mrf.mxu0
        %v910 = vadd.f32 0.0, %v909
        %911 = vmatmul.f32.gmra.mxu0 %v800
        %v912 = vpop.f32.mrf.mxu0
        %v913 = vadd.f32 0.0, %v912
        %914 = vmatmul.f32.gmra.mxu0 %v803
        %v915 = vpop.f32.mrf.mxu0
        %v916 = vadd.f32 0.0, %v915
        %917 = vmatmul.f32.gmra.mxu0 %v806
        %v918 = vpop.f32.mrf.mxu0
        %v919 = vadd.f32 0.0, %v918
        %920 = vmatmul.f32.gmra.mxu0 %v809
        %v921 = vpop.f32.mrf.mxu0
        %v922 = vadd.f32 0.0, %v921
        %923 = vmatmul.f32.gmra.mxu0 %v812
        %v924 = vpop.f32.mrf.mxu0
        %v925 = vadd.f32 0.0, %v924
        %926 = vmatmul.f32.gmra.mxu0 %v815
        %v927 = vpop.f32.mrf.mxu0
        %v928 = vadd.f32 0.0, %v927
        %929 = vmatmul.f32.gmra.mxu0 %v818
        %v930 = vpop.f32.mrf.mxu0
        %v931 = vadd.f32 0.0, %v930
        %932 = vmatmul.f32.gmra.mxu0 %v821
        %v933 = vpop.f32.mrf.mxu0
        %v934 = vadd.f32 0.0, %v933
        %935 = vmatmul.f32.gmra.mxu0 %v824
        %v936 = vpop.f32.mrf.mxu0
        %v937 = vadd.f32 0.0, %v936
        %938 = vmatmul.f32.gmra.mxu0 %v827
        %v939 = vpop.f32.mrf.mxu0
        %v940 = vadd.f32 0.0, %v939
        %941 = vmatmul.f32.gmra.mxu0 %v830
        %v942 = vpop.f32.mrf.mxu0
        %v943 = vadd.f32 0.0, %v942
        %944 = vmatmul.f32.gmra.mxu0 %v833
        %v945 = vpop.f32.mrf.mxu0
        %v946 = vadd.f32 0.0, %v945
        %947 = vmatmul.f32.gmra.mxu0 %v836
        %v948 = vpop.f32.mrf.mxu0
        %v949 = vadd.f32 0.0, %v948
        %950 = vmatmul.f32.gmra.mxu0 %v839
        %v951 = vpop.f32.mrf.mxu0
        %v952 = vadd.f32 0.0, %v951
        %953 = vmatmul.f32.gmra.mxu0 %v842
        %v954 = vpop.f32.mrf.mxu0
        %v955 = vadd.f32 0.0, %v954
        %956 = vmatmul.f32.gmra.mxu0 %v845
        %v957 = vpop.f32.mrf.mxu0
        %v958 = vadd.f32 0.0, %v957
        %959 = vmatmul.f32.gmra.mxu0 %v848
        %v960 = vpop.f32.mrf.mxu0
        %v961 = vadd.f32 0.0, %v960
        %962 = vmatmul.f32.gmra.mxu0 %v851
        %v963 = vpop.f32.mrf.mxu0
        %v964 = vadd.f32 0.0, %v963
        %965 = vdwg.mxu0
        %v966 = vld [vmem:[%s673] sm:$0xff]
        %v967 = vld [vmem:[%s673 + $0x8] sm:$0xff]
        %v968 = vld [vmem:[%s673 + $0x10] sm:$0xff]
        %v969 = vld [vmem:[%s673 + $0x18] sm:$0xff]
        %v970 = vld [vmem:[%s673 + $0x20] sm:$0xff]
        %v971 = vld [vmem:[%s673 + $0x28] sm:$0xff]
        %v972 = vld [vmem:[%s673 + $0x30] sm:$0xff]
        %v973 = vld [vmem:[%s673 + $0x38] sm:$0xff]
        %v974 = vld [vmem:[%s673 + $0x40] sm:$0xff]
        %v975 = vld [vmem:[%s673 + $0x48] sm:$0xff]
        %v976 = vld [vmem:[%s673 + $0x50] sm:$0xff]
        %v977 = vld [vmem:[%s673 + $0x58] sm:$0xff]
        %v978 = vld [vmem:[%s673 + $0x60] sm:$0xff]
        %v979 = vld [vmem:[%s673 + $0x68] sm:$0xff]
        %v980 = vld [vmem:[%s673 + $0x70] sm:$0xff]
        %v981 = vld [vmem:[%s673 + $0x78] sm:$0xff]
        %v982 = vld [vmem:[%s673 + $0x80] sm:$0xff]
        %v983 = vld [vmem:[%s673 + $0x88] sm:$0xff]
        %v984 = vld [vmem:[%s673 + $0x90] sm:$0xff]
        %v985 = vld [vmem:[%s673 + $0x98] sm:$0xff]
        %v986 = vld [vmem:[%s673 + $0xa0] sm:$0xff]
        %v987 = vld [vmem:[%s673 + $0xa8] sm:$0xff]
        %v988 = vld [vmem:[%s673 + $0xb0] sm:$0xff]
        %v989 = vld [vmem:[%s673 + $0xb8] sm:$0xff]
        %v990 = vld [vmem:[%s673 + $0xc0] sm:$0xff]
        %v991 = vld [vmem:[%s673 + $0xc8] sm:$0xff]
        %v992 = vld [vmem:[%s673 + $0xd0] sm:$0xff]
        %v993 = vld [vmem:[%s673 + $0xd8] sm:$0xff]
        %v994 = vld [vmem:[%s673 + $0xe0] sm:$0xff]
        %v995 = vld [vmem:[%s673 + $0xe8] sm:$0xff]
        %v996 = vld [vmem:[%s673 + $0xf0] sm:$0xff]
        %v997 = vld [vmem:[%s673 + $0xf8] sm:$0xff]
        %v998 = vld [vmem:[%s673 + $0x100] sm:$0xff]
        %v999 = vld [vmem:[%s673 + $0x108] sm:$0xff]
        %v1000 = vld [vmem:[%s673 + $0x110] sm:$0xff]
        %v1001 = vld [vmem:[%s673 + $0x118] sm:$0xff]
        %v1002 = vld [vmem:[%s673 + $0x120] sm:$0xff]
        %v1003 = vld [vmem:[%s673 + $0x128] sm:$0xff]
        %v1004 = vld [vmem:[%s673 + $0x130] sm:$0xff]
        %v1005 = vld [vmem:[%s673 + $0x138] sm:$0xff]
        %v1006 = vld [vmem:[%s673 + $0x140] sm:$0xff]
        %v1007 = vld [vmem:[%s673 + $0x148] sm:$0xff]
        %v1008 = vld [vmem:[%s673 + $0x150] sm:$0xff]
        %v1009 = vld [vmem:[%s673 + $0x158] sm:$0xff]
        %v1010 = vld [vmem:[%s673 + $0x160] sm:$0xff]
        %v1011 = vld [vmem:[%s673 + $0x168] sm:$0xff]
        %v1012 = vld [vmem:[%s673 + $0x170] sm:$0xff]
        %v1013 = vld [vmem:[%s673 + $0x178] sm:$0xff]
        %v1014 = vld [vmem:[%s673 + $0x180] sm:$0xff]
        %v1015 = vld [vmem:[%s673 + $0x188] sm:$0xff]
        %v1016 = vld [vmem:[%s673 + $0x190] sm:$0xff]
        %v1017 = vld [vmem:[%s673 + $0x198] sm:$0xff]
        %v1018 = vld [vmem:[%s673 + $0x1a0] sm:$0xff]
        %v1019 = vld [vmem:[%s673 + $0x1a8] sm:$0xff]
        %v1020 = vld [vmem:[%s673 + $0x1b0] sm:$0xff]
        %v1021 = vld [vmem:[%s673 + $0x1b8] sm:$0xff]
        %v1022 = vld [vmem:[%s673 + $0x1c0] sm:$0xff]
        %v1023 = vld [vmem:[%s673 + $0x1c8] sm:$0xff]
        %v1024 = vld [vmem:[%s673 + $0x1d0] sm:$0xff]
        %v1025 = vld [vmem:[%s673 + $0x1d8] sm:$0xff]
        %v1026 = vld [vmem:[%s673 + $0x1e0] sm:$0xff]
        %v1027 = vld [vmem:[%s673 + $0x1e8] sm:$0xff]
        %v1028 = vld [vmem:[%s673 + $0x1f0] sm:$0xff]
        %v1029 = vld [vmem:[%s673 + $0x1f8] sm:$0xff]
        %v1030 = vld [vmem:[%s673 + $0x200] sm:$0xff]
        %v1031 = vld [vmem:[%s673 + $0x208] sm:$0xff]
        %v1032 = vld [vmem:[%s673 + $0x210] sm:$0xff]
        %v1033 = vld [vmem:[%s673 + $0x218] sm:$0xff]
        %v1034 = vld [vmem:[%s673 + $0x220] sm:$0xff]
        %v1035 = vld [vmem:[%s673 + $0x228] sm:$0xff]
        %v1036 = vld [vmem:[%s673 + $0x230] sm:$0xff]
        %v1037 = vld [vmem:[%s673 + $0x238] sm:$0xff]
        %v1038 = vld [vmem:[%s673 + $0x240] sm:$0xff]
        %v1039 = vld [vmem:[%s673 + $0x248] sm:$0xff]
        %v1040 = vld [vmem:[%s673 + $0x250] sm:$0xff]
        %v1041 = vld [vmem:[%s673 + $0x258] sm:$0xff]
        %v1042 = vld [vmem:[%s673 + $0x260] sm:$0xff]
        %v1043 = vld [vmem:[%s673 + $0x268] sm:$0xff]
        %v1044 = vld [vmem:[%s673 + $0x270] sm:$0xff]
        %v1045 = vld [vmem:[%s673 + $0x278] sm:$0xff]
        %v1046 = vld [vmem:[%s673 + $0x280] sm:$0xff]
        %v1047 = vld [vmem:[%s673 + $0x288] sm:$0xff]
        %v1048 = vld [vmem:[%s673 + $0x290] sm:$0xff]
        %v1049 = vld [vmem:[%s673 + $0x298] sm:$0xff]
        %v1050 = vld [vmem:[%s673 + $0x2a0] sm:$0xff]
        %v1051 = vld [vmem:[%s673 + $0x2a8] sm:$0xff]
        %v1052 = vld [vmem:[%s673 + $0x2b0] sm:$0xff]
        %v1053 = vld [vmem:[%s673 + $0x2b8] sm:$0xff]
        %v1054 = vld [vmem:[%s673 + $0x2c0] sm:$0xff]
        %v1055 = vld [vmem:[%s673 + $0x2c8] sm:$0xff]
        %v1056 = vld [vmem:[%s673 + $0x2d0] sm:$0xff]
        %v1057 = vld [vmem:[%s673 + $0x2d8] sm:$0xff]
        %v1058 = vld [vmem:[%s673 + $0x2e0] sm:$0xff]
        %v1059 = vld [vmem:[%s673 + $0x2e8] sm:$0xff]
        %v1060 = vld [vmem:[%s673 + $0x2f0] sm:$0xff]
        %v1061 = vld [vmem:[%s673 + $0x2f8] sm:$0xff]
        %v1062 = vld [vmem:[%s3] sm:$0xff]
        %v1063 = vld [vmem:[%s3 + $0x8] sm:$0xff]
        %v1064 = vld [vmem:[%s3 + $0x10] sm:$0xff]
        %v1065 = vld [vmem:[%s3 + $0x18] sm:$0xff]
        %v1067 = vsel %vm756, %v966, 0
        %v1070 = vsel %vm756, %v967, 0
        %v1073 = vsel %vm756, %v968, 0
        %v1076 = vsel %vm756, %v969, 0
        %v1079 = vsel %vm756, %v970, 0
        %v1082 = vsel %vm756, %v971, 0
        %v1085 = vsel %vm756, %v972, 0
        %v1088 = vsel %vm756, %v973, 0
        %v1091 = vsel %vm756, %v974, 0
        %v1094 = vsel %vm756, %v975, 0
        %v1097 = vsel %vm756, %v976, 0
        %v1100 = vsel %vm756, %v977, 0
        %v1103 = vsel %vm756, %v978, 0
        %v1106 = vsel %vm756, %v979, 0
        %v1109 = vsel %vm756, %v980, 0
        %v1112 = vsel %vm756, %v981, 0
        %v1115 = vsel %vm756, %v982, 0
        %v1118 = vsel %vm756, %v983, 0
        %v1121 = vsel %vm756, %v984, 0
        %v1124 = vsel %vm756, %v985, 0
        %v1127 = vsel %vm756, %v986, 0
        %v1130 = vsel %vm756, %v987, 0
        %v1133 = vsel %vm756, %v988, 0
        %v1136 = vsel %vm756, %v989, 0
        %v1139 = vsel %vm756, %v990, 0
        %v1142 = vsel %vm756, %v991, 0
        %v1145 = vsel %vm756, %v992, 0
        %v1148 = vsel %vm756, %v993, 0
        %v1151 = vsel %vm756, %v994, 0
        %v1154 = vsel %vm756, %v995, 0
        %v1157 = vsel %vm756, %v996, 0
        %v1160 = vsel %vm756, %v997, 0
        %v1163 = vsel %vm756, %v998, 0
        %v1166 = vsel %vm756, %v999, 0
        %v1169 = vsel %vm756, %v1000, 0
        %v1172 = vsel %vm756, %v1001, 0
        %v1175 = vsel %vm756, %v1002, 0
        %v1178 = vsel %vm756, %v1003, 0
        %v1181 = vsel %vm756, %v1004, 0
        %v1184 = vsel %vm756, %v1005, 0
        %v1187 = vsel %vm756, %v1006, 0
        %v1190 = vsel %vm756, %v1007, 0
        %v1193 = vsel %vm756, %v1008, 0
        %v1196 = vsel %vm756, %v1009, 0
        %v1199 = vsel %vm756, %v1010, 0
        %v1202 = vsel %vm756, %v1011, 0
        %v1205 = vsel %vm756, %v1012, 0
        %v1208 = vsel %vm756, %v1013, 0
        %v1211 = vsel %vm756, %v1014, 0
        %v1214 = vsel %vm756, %v1015, 0
        %v1217 = vsel %vm756, %v1016, 0
        %v1220 = vsel %vm756, %v1017, 0
        %v1223 = vsel %vm756, %v1018, 0
        %v1226 = vsel %vm756, %v1019, 0
        %v1229 = vsel %vm756, %v1020, 0
        %v1232 = vsel %vm756, %v1021, 0
        %v1235 = vsel %vm756, %v1022, 0
        %v1238 = vsel %vm756, %v1023, 0
        %v1241 = vsel %vm756, %v1024, 0
        %v1244 = vsel %vm756, %v1025, 0
        %v1247 = vsel %vm756, %v1026, 0
        %v1250 = vsel %vm756, %v1027, 0
        %v1253 = vsel %vm756, %v1028, 0
        %v1256 = vsel %vm756, %v1029, 0
        %v1259 = vsel %vm756, %v1030, 0
        %v1262 = vsel %vm756, %v1031, 0
        %v1265 = vsel %vm756, %v1032, 0
        %v1268 = vsel %vm756, %v1033, 0
        %v1271 = vsel %vm756, %v1034, 0
        %v1274 = vsel %vm756, %v1035, 0
        %v1277 = vsel %vm756, %v1036, 0
        %v1280 = vsel %vm756, %v1037, 0
        %v1283 = vsel %vm756, %v1038, 0
        %v1286 = vsel %vm756, %v1039, 0
        %v1289 = vsel %vm756, %v1040, 0
        %v1292 = vsel %vm756, %v1041, 0
        %v1295 = vsel %vm756, %v1042, 0
        %v1298 = vsel %vm756, %v1043, 0
        %v1301 = vsel %vm756, %v1044, 0
        %v1304 = vsel %vm756, %v1045, 0
        %v1307 = vsel %vm756, %v1046, 0
        %v1310 = vsel %vm756, %v1047, 0
        %v1313 = vsel %vm756, %v1048, 0
        %v1316 = vsel %vm756, %v1049, 0
        %v1319 = vsel %vm756, %v1050, 0
        %v1322 = vsel %vm756, %v1051, 0
        %v1325 = vsel %vm756, %v1052, 0
        %v1328 = vsel %vm756, %v1053, 0
        %v1331 = vsel %vm756, %v1054, 0
        %v1334 = vsel %vm756, %v1055, 0
        %v1337 = vsel %vm756, %v1056, 0
        %v1340 = vsel %vm756, %v1057, 0
        %v1343 = vsel %vm756, %v1058, 0
        %v1346 = vsel %vm756, %v1059, 0
        %v1349 = vsel %vm756, %v1060, 0
        %v1352 = vsel %vm756, %v1061, 0
        %1354 = vmatpush.msra.mxu0 0.0
        %1355 = vmatpush.msra.mxu0 0.0
        %1356 = vmatpush.msra.mxu0 0.0
        %1357 = vmatpush.msra.mxu0 0.0
        %1358 = vmatpush.msra.mxu0 0.0
        %1359 = vmatpush.msra.mxu0 0.0
        %1360 = vmatpush.msra.mxu0 0.0
        %1361 = vmatpush.msra.mxu0 0.0
        %1362 = vmatpush.msra.mxu0 0.0
        %1363 = vmatpush.msra.mxu0 0.0
        %1364 = vmatpush.msra.mxu0 0.0
        %1365 = vmatpush.msra.mxu0 0.0
        %1366 = vmatpush.msra.mxu0 %v1065
        %1367 = vmatpush.msra.mxu0 %v1064
        %1368 = vmatpush.msra.mxu0 %v1063
        %1369 = vmatpush.msra.mxu0 %v1062
        %1370 = vmatmul.f32.gmra.mxu0 %v1067
        %v1371 = vpop.f32.mrf.mxu0
        %v1372 = vadd.f32 0.0, %v1371
        %1373 = vmatmul.f32.gmra.mxu0 %v1070
        %v1374 = vpop.f32.mrf.mxu0
        %v1375 = vadd.f32 0.0, %v1374
        %1376 = vmatmul.f32.gmra.mxu0 %v1073
        %v1377 = vpop.f32.mrf.mxu0
        %v1378 = vadd.f32 0.0, %v1377
        %1379 = vmatmul.f32.gmra.mxu0 %v1076
        %v1380 = vpop.f32.mrf.mxu0
        %v1381 = vadd.f32 0.0, %v1380
        %1382 = vmatmul.f32.gmra.mxu0 %v1079
        %v1383 = vpop.f32.mrf.mxu0
        %v1384 = vadd.f32 0.0, %v1383
        %1385 = vmatmul.f32.gmra.mxu0 %v1082
        %v1386 = vpop.f32.mrf.mxu0
        %v1387 = vadd.f32 0.0, %v1386
        %1388 = vmatmul.f32.gmra.mxu0 %v1085
        %v1389 = vpop.f32.mrf.mxu0
        %v1390 = vadd.f32 0.0, %v1389
        %1391 = vmatmul.f32.gmra.mxu0 %v1088
        %v1392 = vpop.f32.mrf.mxu0
        %v1393 = vadd.f32 0.0, %v1392
        %1394 = vmatmul.f32.gmra.mxu0 %v1091
        %v1395 = vpop.f32.mrf.mxu0
        %v1396 = vadd.f32 0.0, %v1395
        %1397 = vmatmul.f32.gmra.mxu0 %v1094
        %v1398 = vpop.f32.mrf.mxu0
        %v1399 = vadd.f32 0.0, %v1398
        %1400 = vmatmul.f32.gmra.mxu0 %v1097
        %v1401 = vpop.f32.mrf.mxu0
        %v1402 = vadd.f32 0.0, %v1401
        %1403 = vmatmul.f32.gmra.mxu0 %v1100
        %v1404 = vpop.f32.mrf.mxu0
        %v1405 = vadd.f32 0.0, %v1404
        %1406 = vmatmul.f32.gmra.mxu0 %v1103
        %v1407 = vpop.f32.mrf.mxu0
        %v1408 = vadd.f32 0.0, %v1407
        %1409 = vmatmul.f32.gmra.mxu0 %v1106
        %v1410 = vpop.f32.mrf.mxu0
        %v1411 = vadd.f32 0.0, %v1410
        %1412 = vmatmul.f32.gmra.mxu0 %v1109
        %v1413 = vpop.f32.mrf.mxu0
        %v1414 = vadd.f32 0.0, %v1413
        %1415 = vmatmul.f32.gmra.mxu0 %v1112
        %v1416 = vpop.f32.mrf.mxu0
        %v1417 = vadd.f32 0.0, %v1416
        %1418 = vmatmul.f32.gmra.mxu0 %v1115
        %v1419 = vpop.f32.mrf.mxu0
        %v1420 = vadd.f32 0.0, %v1419
        %1421 = vmatmul.f32.gmra.mxu0 %v1118
        %v1422 = vpop.f32.mrf.mxu0
        %v1423 = vadd.f32 0.0, %v1422
        %1424 = vmatmul.f32.gmra.mxu0 %v1121
        %v1425 = vpop.f32.mrf.mxu0
        %v1426 = vadd.f32 0.0, %v1425
        %1427 = vmatmul.f32.gmra.mxu0 %v1124
        %v1428 = vpop.f32.mrf.mxu0
        %v1429 = vadd.f32 0.0, %v1428
        %1430 = vmatmul.f32.gmra.mxu0 %v1127
        %v1431 = vpop.f32.mrf.mxu0
        %v1432 = vadd.f32 0.0, %v1431
        %1433 = vmatmul.f32.gmra.mxu0 %v1130
        %v1434 = vpop.f32.mrf.mxu0
        %v1435 = vadd.f32 0.0, %v1434
        %1436 = vmatmul.f32.gmra.mxu0 %v1133
        %v1437 = vpop.f32.mrf.mxu0
        %v1438 = vadd.f32 0.0, %v1437
        %1439 = vmatmul.f32.gmra.mxu0 %v1136
        %v1440 = vpop.f32.mrf.mxu0
        %v1441 = vadd.f32 0.0, %v1440
        %1442 = vmatmul.f32.gmra.mxu0 %v1139
        %v1443 = vpop.f32.mrf.mxu0
        %v1444 = vadd.f32 0.0, %v1443
        %1445 = vmatmul.f32.gmra.mxu0 %v1142
        %v1446 = vpop.f32.mrf.mxu0
        %v1447 = vadd.f32 0.0, %v1446
        %1448 = vmatmul.f32.gmra.mxu0 %v1145
        %v1449 = vpop.f32.mrf.mxu0
        %v1450 = vadd.f32 0.0, %v1449
        %1451 = vmatmul.f32.gmra.mxu0 %v1148
        %v1452 = vpop.f32.mrf.mxu0
        %v1453 = vadd.f32 0.0, %v1452
        %1454 = vmatmul.f32.gmra.mxu0 %v1151
        %v1455 = vpop.f32.mrf.mxu0
        %v1456 = vadd.f32 0.0, %v1455
        %1457 = vmatmul.f32.gmra.mxu0 %v1154
        %v1458 = vpop.f32.mrf.mxu0
        %v1459 = vadd.f32 0.0, %v1458
        %1460 = vmatmul.f32.gmra.mxu0 %v1157
        %v1461 = vpop.f32.mrf.mxu0
        %v1462 = vadd.f32 0.0, %v1461
        %1463 = vmatmul.f32.gmra.mxu0 %v1160
        %v1464 = vpop.f32.mrf.mxu0
        %v1465 = vadd.f32 0.0, %v1464
        %1466 = vmatmul.f32.gmra.mxu0 %v1163
        %v1467 = vpop.f32.mrf.mxu0
        %v1468 = vadd.f32 0.0, %v1467
        %1469 = vmatmul.f32.gmra.mxu0 %v1166
        %v1470 = vpop.f32.mrf.mxu0
        %v1471 = vadd.f32 0.0, %v1470
        %1472 = vmatmul.f32.gmra.mxu0 %v1169
        %v1473 = vpop.f32.mrf.mxu0
        %v1474 = vadd.f32 0.0, %v1473
        %1475 = vmatmul.f32.gmra.mxu0 %v1172
        %v1476 = vpop.f32.mrf.mxu0
        %v1477 = vadd.f32 0.0, %v1476
        %1478 = vmatmul.f32.gmra.mxu0 %v1175
        %v1479 = vpop.f32.mrf.mxu0
        %v1480 = vadd.f32 0.0, %v1479
        %1481 = vmatmul.f32.gmra.mxu0 %v1178
        %v1482 = vpop.f32.mrf.mxu0
        %v1483 = vadd.f32 0.0, %v1482
        %1484 = vmatmul.f32.gmra.mxu0 %v1181
        %v1485 = vpop.f32.mrf.mxu0
        %v1486 = vadd.f32 0.0, %v1485
        %1487 = vmatmul.f32.gmra.mxu0 %v1184
        %v1488 = vpop.f32.mrf.mxu0
        %v1489 = vadd.f32 0.0, %v1488
        %1490 = vmatmul.f32.gmra.mxu0 %v1187
        %v1491 = vpop.f32.mrf.mxu0
        %v1492 = vadd.f32 0.0, %v1491
        %1493 = vmatmul.f32.gmra.mxu0 %v1190
        %v1494 = vpop.f32.mrf.mxu0
        %v1495 = vadd.f32 0.0, %v1494
        %1496 = vmatmul.f32.gmra.mxu0 %v1193
        %v1497 = vpop.f32.mrf.mxu0
        %v1498 = vadd.f32 0.0, %v1497
        %1499 = vmatmul.f32.gmra.mxu0 %v1196
        %v1500 = vpop.f32.mrf.mxu0
        %v1501 = vadd.f32 0.0, %v1500
        %1502 = vmatmul.f32.gmra.mxu0 %v1199
        %v1503 = vpop.f32.mrf.mxu0
        %v1504 = vadd.f32 0.0, %v1503
        %1505 = vmatmul.f32.gmra.mxu0 %v1202
        %v1506 = vpop.f32.mrf.mxu0
        %v1507 = vadd.f32 0.0, %v1506
        %1508 = vmatmul.f32.gmra.mxu0 %v1205
        %v1509 = vpop.f32.mrf.mxu0
        %v1510 = vadd.f32 0.0, %v1509
        %1511 = vmatmul.f32.gmra.mxu0 %v1208
        %v1512 = vpop.f32.mrf.mxu0
        %v1513 = vadd.f32 0.0, %v1512
        %1514 = vmatmul.f32.gmra.mxu0 %v1211
        %v1515 = vpop.f32.mrf.mxu0
        %v1516 = vadd.f32 0.0, %v1515
        %1517 = vmatmul.f32.gmra.mxu0 %v1214
        %v1518 = vpop.f32.mrf.mxu0
        %v1519 = vadd.f32 0.0, %v1518
        %1520 = vmatmul.f32.gmra.mxu0 %v1217
        %v1521 = vpop.f32.mrf.mxu0
        %v1522 = vadd.f32 0.0, %v1521
        %1523 = vmatmul.f32.gmra.mxu0 %v1220
        %v1524 = vpop.f32.mrf.mxu0
        %v1525 = vadd.f32 0.0, %v1524
        %1526 = vmatmul.f32.gmra.mxu0 %v1223
        %v1527 = vpop.f32.mrf.mxu0
        %v1528 = vadd.f32 0.0, %v1527
        %1529 = vmatmul.f32.gmra.mxu0 %v1226
        %v1530 = vpop.f32.mrf.mxu0
        %v1531 = vadd.f32 0.0, %v1530
        %1532 = vmatmul.f32.gmra.mxu0 %v1229
        %v1533 = vpop.f32.mrf.mxu0
        %v1534 = vadd.f32 0.0, %v1533
        %1535 = vmatmul.f32.gmra.mxu0 %v1232
        %v1536 = vpop.f32.mrf.mxu0
        %v1537 = vadd.f32 0.0, %v1536
        %1538 = vmatmul.f32.gmra.mxu0 %v1235
        %v1539 = vpop.f32.mrf.mxu0
        %v1540 = vadd.f32 0.0, %v1539
        %1541 = vmatmul.f32.gmra.mxu0 %v1238
        %v1542 = vpop.f32.mrf.mxu0
        %v1543 = vadd.f32 0.0, %v1542
        %1544 = vmatmul.f32.gmra.mxu0 %v1241
        %v1545 = vpop.f32.mrf.mxu0
        %v1546 = vadd.f32 0.0, %v1545
        %1547 = vmatmul.f32.gmra.mxu0 %v1244
        %v1548 = vpop.f32.mrf.mxu0
        %v1549 = vadd.f32 0.0, %v1548
        %1550 = vmatmul.f32.gmra.mxu0 %v1247
        %v1551 = vpop.f32.mrf.mxu0
        %v1552 = vadd.f32 0.0, %v1551
        %1553 = vmatmul.f32.gmra.mxu0 %v1250
        %v1554 = vpop.f32.mrf.mxu0
        %v1555 = vadd.f32 0.0, %v1554
        %1556 = vmatmul.f32.gmra.mxu0 %v1253
        %v1557 = vpop.f32.mrf.mxu0
        %v1558 = vadd.f32 0.0, %v1557
        %1559 = vmatmul.f32.gmra.mxu0 %v1256
        %v1560 = vpop.f32.mrf.mxu0
        %v1561 = vadd.f32 0.0, %v1560
        %1562 = vmatmul.f32.gmra.mxu0 %v1259
        %v1563 = vpop.f32.mrf.mxu0
        %v1564 = vadd.f32 0.0, %v1563
        %1565 = vmatmul.f32.gmra.mxu0 %v1262
        %v1566 = vpop.f32.mrf.mxu0
        %v1567 = vadd.f32 0.0, %v1566
        %1568 = vmatmul.f32.gmra.mxu0 %v1265
        %v1569 = vpop.f32.mrf.mxu0
        %v1570 = vadd.f32 0.0, %v1569
        %1571 = vmatmul.f32.gmra.mxu0 %v1268
        %v1572 = vpop.f32.mrf.mxu0
        %v1573 = vadd.f32 0.0, %v1572
        %1574 = vmatmul.f32.gmra.mxu0 %v1271
        %v1575 = vpop.f32.mrf.mxu0
        %v1576 = vadd.f32 0.0, %v1575
        %1577 = vmatmul.f32.gmra.mxu0 %v1274
        %v1578 = vpop.f32.mrf.mxu0
        %v1579 = vadd.f32 0.0, %v1578
        %1580 = vmatmul.f32.gmra.mxu0 %v1277
        %v1581 = vpop.f32.mrf.mxu0
        %v1582 = vadd.f32 0.0, %v1581
        %1583 = vmatmul.f32.gmra.mxu0 %v1280
        %v1584 = vpop.f32.mrf.mxu0
        %v1585 = vadd.f32 0.0, %v1584
        %1586 = vmatmul.f32.gmra.mxu0 %v1283
        %v1587 = vpop.f32.mrf.mxu0
        %v1588 = vadd.f32 0.0, %v1587
        %1589 = vmatmul.f32.gmra.mxu0 %v1286
        %v1590 = vpop.f32.mrf.mxu0
        %v1591 = vadd.f32 0.0, %v1590
        %1592 = vmatmul.f32.gmra.mxu0 %v1289
        %v1593 = vpop.f32.mrf.mxu0
        %v1594 = vadd.f32 0.0, %v1593
        %1595 = vmatmul.f32.gmra.mxu0 %v1292
        %v1596 = vpop.f32.mrf.mxu0
        %v1597 = vadd.f32 0.0, %v1596
        %1598 = vmatmul.f32.gmra.mxu0 %v1295
        %v1599 = vpop.f32.mrf.mxu0
        %v1600 = vadd.f32 0.0, %v1599
        %1601 = vmatmul.f32.gmra.mxu0 %v1298
        %v1602 = vpop.f32.mrf.mxu0
        %v1603 = vadd.f32 0.0, %v1602
        %1604 = vmatmul.f32.gmra.mxu0 %v1301
        %v1605 = vpop.f32.mrf.mxu0
        %v1606 = vadd.f32 0.0, %v1605
        %1607 = vmatmul.f32.gmra.mxu0 %v1304
        %v1608 = vpop.f32.mrf.mxu0
        %v1609 = vadd.f32 0.0, %v1608
        %1610 = vmatmul.f32.gmra.mxu0 %v1307
        %v1611 = vpop.f32.mrf.mxu0
        %v1612 = vadd.f32 0.0, %v1611
        %1613 = vmatmul.f32.gmra.mxu0 %v1310
        %v1614 = vpop.f32.mrf.mxu0
        %v1615 = vadd.f32 0.0, %v1614
        %1616 = vmatmul.f32.gmra.mxu0 %v1313
        %v1617 = vpop.f32.mrf.mxu0
        %v1618 = vadd.f32 0.0, %v1617
        %1619 = vmatmul.f32.gmra.mxu0 %v1316
        %v1620 = vpop.f32.mrf.mxu0
        %v1621 = vadd.f32 0.0, %v1620
        %1622 = vmatmul.f32.gmra.mxu0 %v1319
        %v1623 = vpop.f32.mrf.mxu0
        %v1624 = vadd.f32 0.0, %v1623
        %1625 = vmatmul.f32.gmra.mxu0 %v1322
        %v1626 = vpop.f32.mrf.mxu0
        %v1627 = vadd.f32 0.0, %v1626
        %1628 = vmatmul.f32.gmra.mxu0 %v1325
        %v1629 = vpop.f32.mrf.mxu0
        %v1630 = vadd.f32 0.0, %v1629
        %1631 = vmatmul.f32.gmra.mxu0 %v1328
        %v1632 = vpop.f32.mrf.mxu0
        %v1633 = vadd.f32 0.0, %v1632
        %1634 = vmatmul.f32.gmra.mxu0 %v1331
        %v1635 = vpop.f32.mrf.mxu0
        %v1636 = vadd.f32 0.0, %v1635
        %1637 = vmatmul.f32.gmra.mxu0 %v1334
        %v1638 = vpop.f32.mrf.mxu0
        %v1639 = vadd.f32 0.0, %v1638
        %1640 = vmatmul.f32.gmra.mxu0 %v1337
        %v1641 = vpop.f32.mrf.mxu0
        %v1642 = vadd.f32 0.0, %v1641
        %1643 = vmatmul.f32.gmra.mxu0 %v1340
        %v1644 = vpop.f32.mrf.mxu0
        %v1645 = vadd.f32 0.0, %v1644
        %1646 = vmatmul.f32.gmra.mxu0 %v1343
        %v1647 = vpop.f32.mrf.mxu0
        %v1648 = vadd.f32 0.0, %v1647
        %1649 = vmatmul.f32.gmra.mxu0 %v1346
        %v1650 = vpop.f32.mrf.mxu0
        %v1651 = vadd.f32 0.0, %v1650
        %1652 = vmatmul.f32.gmra.mxu0 %v1349
        %v1653 = vpop.f32.mrf.mxu0
        %v1654 = vadd.f32 0.0, %v1653
        %1655 = vmatmul.f32.gmra.mxu0 %v1352
        %v1656 = vpop.f32.mrf.mxu0
        %v1657 = vadd.f32 0.0, %v1656
        %1658 = vdwg.mxu0
        %v1659 = vadd.f32 %v1372, %v871
        %v1660 = vadd.f32 %v1375, %v874
        %v1661 = vadd.f32 %v1378, %v877
        %v1662 = vadd.f32 %v1381, %v880
        %v1663 = vadd.f32 %v1384, %v883
        %v1664 = vadd.f32 %v1387, %v886
        %v1665 = vadd.f32 %v1390, %v889
        %v1666 = vadd.f32 %v1393, %v892
        %v1667 = vadd.f32 %v1396, %v895
        %v1668 = vadd.f32 %v1399, %v898
        %v1669 = vadd.f32 %v1402, %v901
        %v1670 = vadd.f32 %v1405, %v904
        %v1671 = vadd.f32 %v1408, %v907
        %v1672 = vadd.f32 %v1411, %v910
        %v1673 = vadd.f32 %v1414, %v913
        %v1674 = vadd.f32 %v1417, %v916
        %v1675 = vadd.f32 %v1420, %v919
        %v1676 = vadd.f32 %v1423, %v922
        %v1677 = vadd.f32 %v1426, %v925
        %v1678 = vadd.f32 %v1429, %v928
        %v1679 = vadd.f32 %v1432, %v931
        %v1680 = vadd.f32 %v1435, %v934
        %v1681 = vadd.f32 %v1438, %v937
        %v1682 = vadd.f32 %v1441, %v940
        %v1683 = vadd.f32 %v1444, %v943
        %v1684 = vadd.f32 %v1447, %v946
        %v1685 = vadd.f32 %v1450, %v949
        %v1686 = vadd.f32 %v1453, %v952
        %v1687 = vadd.f32 %v1456, %v955
        %v1688 = vadd.f32 %v1459, %v958
        %v1689 = vadd.f32 %v1462, %v961
        %v1690 = vadd.f32 %v1465, %v964
        %v1691 = vadd.f32 %v1468, %v871
        %v1692 = vadd.f32 %v1471, %v874
        %v1693 = vadd.f32 %v1474, %v877
        %v1694 = vadd.f32 %v1477, %v880
        %v1695 = vadd.f32 %v1480, %v883
        %v1696 = vadd.f32 %v1483, %v886
        %v1697 = vadd.f32 %v1486, %v889
        %v1698 = vadd.f32 %v1489, %v892
        %v1699 = vadd.f32 %v1492, %v895
        %v1700 = vadd.f32 %v1495, %v898
        %v1701 = vadd.f32 %v1498, %v901
        %v1702 = vadd.f32 %v1501, %v904
        %v1703 = vadd.f32 %v1504, %v907
        %v1704 = vadd.f32 %v1507, %v910
        %v1705 = vadd.f32 %v1510, %v913
        %v1706 = vadd.f32 %v1513, %v916
        %v1707 = vadd.f32 %v1516, %v919
        %v1708 = vadd.f32 %v1519, %v922
        %v1709 = vadd.f32 %v1522, %v925
        %v1710 = vadd.f32 %v1525, %v928
        %v1711 = vadd.f32 %v1528, %v931
        %v1712 = vadd.f32 %v1531, %v934
        %v1713 = vadd.f32 %v1534, %v937
        %v1714 = vadd.f32 %v1537, %v940
        %v1715 = vadd.f32 %v1540, %v943
        %v1716 = vadd.f32 %v1543, %v946
        %v1717 = vadd.f32 %v1546, %v949
        %v1718 = vadd.f32 %v1549, %v952
        %v1719 = vadd.f32 %v1552, %v955
        %v1720 = vadd.f32 %v1555, %v958
        %v1721 = vadd.f32 %v1558, %v961
        %v1722 = vadd.f32 %v1561, %v964
        %v1723 = vadd.f32 %v1564, %v871
        %v1724 = vadd.f32 %v1567, %v874
        %v1725 = vadd.f32 %v1570, %v877
        %v1726 = vadd.f32 %v1573, %v880
        %v1727 = vadd.f32 %v1576, %v883
        %v1728 = vadd.f32 %v1579, %v886
        %v1729 = vadd.f32 %v1582, %v889
        %v1730 = vadd.f32 %v1585, %v892
        %v1731 = vadd.f32 %v1588, %v895
        %v1732 = vadd.f32 %v1591, %v898
        %v1733 = vadd.f32 %v1594, %v901
        %v1734 = vadd.f32 %v1597, %v904
        %v1735 = vadd.f32 %v1600, %v907
        %v1736 = vadd.f32 %v1603, %v910
        %v1737 = vadd.f32 %v1606, %v913
        %v1738 = vadd.f32 %v1609, %v916
        %v1739 = vadd.f32 %v1612, %v919
        %v1740 = vadd.f32 %v1615, %v922
        %v1741 = vadd.f32 %v1618, %v925
        %v1742 = vadd.f32 %v1621, %v928
        %v1743 = vadd.f32 %v1624, %v931
        %v1744 = vadd.f32 %v1627, %v934
        %v1745 = vadd.f32 %v1630, %v937
        %v1746 = vadd.f32 %v1633, %v940
        %v1747 = vadd.f32 %v1636, %v943
        %v1748 = vadd.f32 %v1639, %v946
        %v1749 = vadd.f32 %v1642, %v949
        %v1750 = vadd.f32 %v1645, %v952
        %v1751 = vadd.f32 %v1648, %v955
        %v1752 = vadd.f32 %v1651, %v958
        %v1753 = vadd.f32 %v1654, %v961
        %v1754 = vadd.f32 %v1657, %v964
        %v1755 = vld [vmem:[%s4] sm:$0x1]
        %v1757 = vperm.slane %v1755, 0
        %v1759 = vadd.f32 %v1659, %v1757
        %v1760 = vadd.f32 %v1660, %v1757
        %v1761 = vadd.f32 %v1661, %v1757
        %v1762 = vadd.f32 %v1662, %v1757
        %v1763 = vadd.f32 %v1663, %v1757
        %v1764 = vadd.f32 %v1664, %v1757
        %v1765 = vadd.f32 %v1665, %v1757
        %v1766 = vadd.f32 %v1666, %v1757
        %v1767 = vadd.f32 %v1667, %v1757
        %v1768 = vadd.f32 %v1668, %v1757
        %v1769 = vadd.f32 %v1669, %v1757
        %v1770 = vadd.f32 %v1670, %v1757
        %v1771 = vadd.f32 %v1671, %v1757
        %v1772 = vadd.f32 %v1672, %v1757
        %v1773 = vadd.f32 %v1673, %v1757
        %v1774 = vadd.f32 %v1674, %v1757
        %v1775 = vadd.f32 %v1675, %v1757
        %v1776 = vadd.f32 %v1676, %v1757
        %v1777 = vadd.f32 %v1677, %v1757
        %v1778 = vadd.f32 %v1678, %v1757
        %v1779 = vadd.f32 %v1679, %v1757
        %v1780 = vadd.f32 %v1680, %v1757
        %v1781 = vadd.f32 %v1681, %v1757
        %v1782 = vadd.f32 %v1682, %v1757
        %v1783 = vadd.f32 %v1683, %v1757
        %v1784 = vadd.f32 %v1684, %v1757
        %v1785 = vadd.f32 %v1685, %v1757
        %v1786 = vadd.f32 %v1686, %v1757
        %v1787 = vadd.f32 %v1687, %v1757
        %v1788 = vadd.f32 %v1688, %v1757
        %v1789 = vadd.f32 %v1689, %v1757
        %v1790 = vadd.f32 %v1690, %v1757
        %v1791 = vadd.f32 %v1691, %v1757
        %v1792 = vadd.f32 %v1692, %v1757
        %v1793 = vadd.f32 %v1693, %v1757
        %v1794 = vadd.f32 %v1694, %v1757
        %v1795 = vadd.f32 %v1695, %v1757
        %v1796 = vadd.f32 %v1696, %v1757
        %v1797 = vadd.f32 %v1697, %v1757
        %v1798 = vadd.f32 %v1698, %v1757
        %v1799 = vadd.f32 %v1699, %v1757
        %v1800 = vadd.f32 %v1700, %v1757
        %v1801 = vadd.f32 %v1701, %v1757
        %v1802 = vadd.f32 %v1702, %v1757
        %v1803 = vadd.f32 %v1703, %v1757
        %v1804 = vadd.f32 %v1704, %v1757
        %v1805 = vadd.f32 %v1705, %v1757
        %v1806 = vadd.f32 %v1706, %v1757
        %v1807 = vadd.f32 %v1707, %v1757
        %v1808 = vadd.f32 %v1708, %v1757
        %v1809 = vadd.f32 %v1709, %v1757
        %v1810 = vadd.f32 %v1710, %v1757
        %v1811 = vadd.f32 %v1711, %v1757
        %v1812 = vadd.f32 %v1712, %v1757
        %v1813 = vadd.f32 %v1713, %v1757
        %v1814 = vadd.f32 %v1714, %v1757
        %v1815 = vadd.f32 %v1715, %v1757
        %v1816 = vadd.f32 %v1716, %v1757
        %v1817 = vadd.f32 %v1717, %v1757
        %v1818 = vadd.f32 %v1718, %v1757
        %v1819 = vadd.f32 %v1719, %v1757
        %v1820 = vadd.f32 %v1720, %v1757
        %v1821 = vadd.f32 %v1721, %v1757
        %v1822 = vadd.f32 %v1722, %v1757
        %v1823 = vadd.f32 %v1723, %v1757
        %v1824 = vadd.f32 %v1724, %v1757
        %v1825 = vadd.f32 %v1725, %v1757
        %v1826 = vadd.f32 %v1726, %v1757
        %v1827 = vadd.f32 %v1727, %v1757
        %v1828 = vadd.f32 %v1728, %v1757
        %v1829 = vadd.f32 %v1729, %v1757
        %v1830 = vadd.f32 %v1730, %v1757
        %v1831 = vadd.f32 %v1731, %v1757
        %v1832 = vadd.f32 %v1732, %v1757
        %v1833 = vadd.f32 %v1733, %v1757
        %v1834 = vadd.f32 %v1734, %v1757
        %v1835 = vadd.f32 %v1735, %v1757
        %v1836 = vadd.f32 %v1736, %v1757
        %v1837 = vadd.f32 %v1737, %v1757
        %v1838 = vadd.f32 %v1738, %v1757
        %v1839 = vadd.f32 %v1739, %v1757
        %v1840 = vadd.f32 %v1740, %v1757
        %v1841 = vadd.f32 %v1741, %v1757
        %v1842 = vadd.f32 %v1742, %v1757
        %v1843 = vadd.f32 %v1743, %v1757
        %v1844 = vadd.f32 %v1744, %v1757
        %v1845 = vadd.f32 %v1745, %v1757
        %v1846 = vadd.f32 %v1746, %v1757
        %v1847 = vadd.f32 %v1747, %v1757
        %v1848 = vadd.f32 %v1748, %v1757
        %v1849 = vadd.f32 %v1749, %v1757
        %v1850 = vadd.f32 %v1750, %v1757
        %v1851 = vadd.f32 %v1751, %v1757
        %v1852 = vadd.f32 %v1752, %v1757
        %v1853 = vadd.f32 %v1753, %v1757
        %v1854 = vadd.f32 %v1754, %v1757
        %v1855 = vmax.f32 %v1759, 0.0
        %v1856 = vmax.f32 %v1760, 0.0
        %v1857 = vmax.f32 %v1761, 0.0
        %v1858 = vmax.f32 %v1762, 0.0
        %v1859 = vmax.f32 %v1763, 0.0
        %v1860 = vmax.f32 %v1764, 0.0
        %v1861 = vmax.f32 %v1765, 0.0
        %v1862 = vmax.f32 %v1766, 0.0
        %v1863 = vmax.f32 %v1767, 0.0
        %v1864 = vmax.f32 %v1768, 0.0
        %v1865 = vmax.f32 %v1769, 0.0
        %v1866 = vmax.f32 %v1770, 0.0
        %v1867 = vmax.f32 %v1771, 0.0
        %v1868 = vmax.f32 %v1772, 0.0
        %v1869 = vmax.f32 %v1773, 0.0
        %v1870 = vmax.f32 %v1774, 0.0
        %v1871 = vmax.f32 %v1775, 0.0
        %v1872 = vmax.f32 %v1776, 0.0
        %v1873 = vmax.f32 %v1777, 0.0
        %v1874 = vmax.f32 %v1778, 0.0
        %v1875 = vmax.f32 %v1779, 0.0
        %v1876 = vmax.f32 %v1780, 0.0
        %v1877 = vmax.f32 %v1781, 0.0
        %v1878 = vmax.f32 %v1782, 0.0
        %v1879 = vmax.f32 %v1783, 0.0
        %v1880 = vmax.f32 %v1784, 0.0
        %v1881 = vmax.f32 %v1785, 0.0
        %v1882 = vmax.f32 %v1786, 0.0
        %v1883 = vmax.f32 %v1787, 0.0
        %v1884 = vmax.f32 %v1788, 0.0
        %v1885 = vmax.f32 %v1789, 0.0
        %v1886 = vmax.f32 %v1790, 0.0
        %v1887 = vmax.f32 %v1791, 0.0
        %v1888 = vmax.f32 %v1792, 0.0
        %v1889 = vmax.f32 %v1793, 0.0
        %v1890 = vmax.f32 %v1794, 0.0
        %v1891 = vmax.f32 %v1795, 0.0
        %v1892 = vmax.f32 %v1796, 0.0
        %v1893 = vmax.f32 %v1797, 0.0
        %v1894 = vmax.f32 %v1798, 0.0
        %v1895 = vmax.f32 %v1799, 0.0
        %v1896 = vmax.f32 %v1800, 0.0
        %v1897 = vmax.f32 %v1801, 0.0
        %v1898 = vmax.f32 %v1802, 0.0
        %v1899 = vmax.f32 %v1803, 0.0
        %v1900 = vmax.f32 %v1804, 0.0
        %v1901 = vmax.f32 %v1805, 0.0
        %v1902 = vmax.f32 %v1806, 0.0
        %v1903 = vmax.f32 %v1807, 0.0
        %v1904 = vmax.f32 %v1808, 0.0
        %v1905 = vmax.f32 %v1809, 0.0
        %v1906 = vmax.f32 %v1810, 0.0
        %v1907 = vmax.f32 %v1811, 0.0
        %v1908 = vmax.f32 %v1812, 0.0
        %v1909 = vmax.f32 %v1813, 0.0
        %v1910 = vmax.f32 %v1814, 0.0
        %v1911 = vmax.f32 %v1815, 0.0
        %v1912 = vmax.f32 %v1816, 0.0
        %v1913 = vmax.f32 %v1817, 0.0
        %v1914 = vmax.f32 %v1818, 0.0
        %v1915 = vmax.f32 %v1819, 0.0
        %v1916 = vmax.f32 %v1820, 0.0
        %v1917 = vmax.f32 %v1821, 0.0
        %v1918 = vmax.f32 %v1822, 0.0
        %v1919 = vmax.f32 %v1823, 0.0
        %v1920 = vmax.f32 %v1824, 0.0
        %v1921 = vmax.f32 %v1825, 0.0
        %v1922 = vmax.f32 %v1826, 0.0
        %v1923 = vmax.f32 %v1827, 0.0
        %v1924 = vmax.f32 %v1828, 0.0
        %v1925 = vmax.f32 %v1829, 0.0
        %v1926 = vmax.f32 %v1830, 0.0
        %v1927 = vmax.f32 %v1831, 0.0
        %v1928 = vmax.f32 %v1832, 0.0
        %v1929 = vmax.f32 %v1833, 0.0
        %v1930 = vmax.f32 %v1834, 0.0
        %v1931 = vmax.f32 %v1835, 0.0
        %v1932 = vmax.f32 %v1836, 0.0
        %v1933 = vmax.f32 %v1837, 0.0
        %v1934 = vmax.f32 %v1838, 0.0
        %v1935 = vmax.f32 %v1839, 0.0
        %v1936 = vmax.f32 %v1840, 0.0
        %v1937 = vmax.f32 %v1841, 0.0
        %v1938 = vmax.f32 %v1842, 0.0
        %v1939 = vmax.f32 %v1843, 0.0
        %v1940 = vmax.f32 %v1844, 0.0
        %v1941 = vmax.f32 %v1845, 0.0
        %v1942 = vmax.f32 %v1846, 0.0
        %v1943 = vmax.f32 %v1847, 0.0
        %v1944 = vmax.f32 %v1848, 0.0
        %v1945 = vmax.f32 %v1849, 0.0
        %v1946 = vmax.f32 %v1850, 0.0
        %v1947 = vmax.f32 %v1851, 0.0
        %v1948 = vmax.f32 %v1852, 0.0
        %v1949 = vmax.f32 %v1853, 0.0
        %v1950 = vmax.f32 %v1854, 0.0
        %v1951 = vld [vmem:[%s5] sm:$0xff]
        %s1952 = sld [smem:[#allocation2]]
        %v1953 = vstv %s1952
        %v1955 = vsel %vm756, %v1951, 0
        %v1958 = vsel %vm756, %v1855, 0
        %v1961 = vsel %vm756, %v1856, 0
        %v1964 = vsel %vm756, %v1857, 0
        %v1967 = vsel %vm756, %v1858, 0
        %v1970 = vsel %vm756, %v1859, 0
        %v1973 = vsel %vm756, %v1860, 0
        %v1976 = vsel %vm756, %v1861, 0
        %v1979 = vsel %vm756, %v1862, 0
        %v1982 = vsel %vm756, %v1863, 0
        %v1985 = vsel %vm756, %v1864, 0
        %v1988 = vsel %vm756, %v1865, 0
        %v1991 = vsel %vm756, %v1866, 0
        %v1994 = vsel %vm756, %v1867, 0
        %v1997 = vsel %vm756, %v1868, 0
        %v2000 = vsel %vm756, %v1869, 0
        %v2003 = vsel %vm756, %v1870, 0
        %v2006 = vsel %vm756, %v1871, 0
        %v2009 = vsel %vm756, %v1872, 0
        %v2012 = vsel %vm756, %v1873, 0
        %v2015 = vsel %vm756, %v1874, 0
        %v2018 = vsel %vm756, %v1875, 0
        %v2021 = vsel %vm756, %v1876, 0
        %v2024 = vsel %vm756, %v1877, 0
        %v2027 = vsel %vm756, %v1878, 0
        %v2030 = vsel %vm756, %v1879, 0
        %v2033 = vsel %vm756, %v1880, 0
        %v2036 = vsel %vm756, %v1881, 0
        %v2039 = vsel %vm756, %v1882, 0
        %v2042 = vsel %vm756, %v1883, 0
        %v2045 = vsel %vm756, %v1884, 0
        %v2048 = vsel %vm756, %v1885, 0
        %v2051 = vsel %vm756, %v1886, 0
        %v2054 = vsel %vm756, %v1887, 0
        %v2057 = vsel %vm756, %v1888, 0
        %v2060 = vsel %vm756, %v1889, 0
        %v2063 = vsel %vm756, %v1890, 0
        %v2066 = vsel %vm756, %v1891, 0
        %v2069 = vsel %vm756, %v1892, 0
        %v2072 = vsel %vm756, %v1893, 0
        %v2075 = vsel %vm756, %v1894, 0
        %v2078 = vsel %vm756, %v1895, 0
        %v2081 = vsel %vm756, %v1896, 0
        %v2084 = vsel %vm756, %v1897, 0
        %v2087 = vsel %vm756, %v1898, 0
        %v2090 = vsel %vm756, %v1899, 0
        %v2093 = vsel %vm756, %v1900, 0
        %v2096 = vsel %vm756, %v1901, 0
        %v2099 = vsel %vm756, %v1902, 0
        %v2102 = vsel %vm756, %v1903, 0
        %v2105 = vsel %vm756, %v1904, 0
        %v2108 = vsel %vm756, %v1905, 0
        %v2111 = vsel %vm756, %v1906, 0
        %v2114 = vsel %vm756, %v1907, 0
        %v2117 = vsel %vm756, %v1908, 0
        %v2120 = vsel %vm756, %v1909, 0
        %v2123 = vsel %vm756, %v1910, 0
        %v2126 = vsel %vm756, %v1911, 0
        %v2129 = vsel %vm756, %v1912, 0
        %v2132 = vsel %vm756, %v1913, 0
        %v2135 = vsel %vm756, %v1914, 0
        %v2138 = vsel %vm756, %v1915, 0
        %v2141 = vsel %vm756, %v1916, 0
        %v2144 = vsel %vm756, %v1917, 0
        %v2147 = vsel %vm756, %v1918, 0
        %v2150 = vsel %vm756, %v1919, 0
        %v2153 = vsel %vm756, %v1920, 0
        %v2156 = vsel %vm756, %v1921, 0
        %v2159 = vsel %vm756, %v1922, 0
        %v2162 = vsel %vm756, %v1923, 0
        %v2165 = vsel %vm756, %v1924, 0
        %v2168 = vsel %vm756, %v1925, 0
        %v2171 = vsel %vm756, %v1926, 0
        %v2174 = vsel %vm756, %v1927, 0
        %v2177 = vsel %vm756, %v1928, 0
        %v2180 = vsel %vm756, %v1929, 0
        %v2183 = vsel %vm756, %v1930, 0
        %v2186 = vsel %vm756, %v1931, 0
        %v2189 = vsel %vm756, %v1932, 0
        %v2192 = vsel %vm756, %v1933, 0
        %v2195 = vsel %vm756, %v1934, 0
        %v2198 = vsel %vm756, %v1935, 0
        %v2201 = vsel %vm756, %v1936, 0
        %v2204 = vsel %vm756, %v1937, 0
        %v2207 = vsel %vm756, %v1938, 0
        %v2210 = vsel %vm756, %v1939, 0
        %v2213 = vsel %vm756, %v1940, 0
        %v2216 = vsel %vm756, %v1941, 0
        %v2219 = vsel %vm756, %v1942, 0
        %v2222 = vsel %vm756, %v1943, 0
        %v2225 = vsel %vm756, %v1944, 0
        %v2228 = vsel %vm756, %v1945, 0
        %v2231 = vsel %vm756, %v1946, 0
        %v2234 = vsel %vm756, %v1947, 0
        %v2237 = vsel %vm756, %v1948, 0
        %v2240 = vsel %vm756, %v1949, 0
        %v2243 = vsel %vm756, %v1950, 0
        %2245 = vmatpush.xpose.msra.mxu0 %v2003
        %2246 = vmatpush.xpose.msra.mxu0 %v2000
        %2247 = vmatpush.xpose.msra.mxu0 %v1997
        %2248 = vmatpush.xpose.msra.mxu0 %v1994
        %2249 = vmatpush.xpose.msra.mxu0 %v1991
        %2250 = vmatpush.xpose.msra.mxu0 %v1988
        %2251 = vmatpush.xpose.msra.mxu0 %v1985
        %2252 = vmatpush.xpose.msra.mxu0 %v1982
        %2253 = vmatpush.xpose.msra.mxu0 %v1979
        %2254 = vmatpush.xpose.msra.mxu0 %v1976
        %2255 = vmatpush.xpose.msra.mxu0 %v1973
        %2256 = vmatpush.xpose.msra.mxu0 %v1970
        %2257 = vmatpush.xpose.msra.mxu0 %v1967
        %2258 = vmatpush.xpose.msra.mxu0 %v1964
        %2259 = vmatpush.xpose.msra.mxu0 %v1961
        %2260 = vmatpush.xpose.msra.mxu0 %v1958
        %2261 = vmatmul.f32.gmra.mxu0 %v1955
        %v2262 = vpop.f32.mrf.mxu0
        %v2263 = vadd.f32 %v1953, %v2262
        %2264 = vdwg.mxu0
        %2265 = vmatpush.xpose.msra.mxu0 %v2051
        %2266 = vmatpush.xpose.msra.mxu0 %v2048
        %2267 = vmatpush.xpose.msra.mxu0 %v2045
        %2268 = vmatpush.xpose.msra.mxu0 %v2042
        %2269 = vmatpush.xpose.msra.mxu0 %v2039
        %2270 = vmatpush.xpose.msra.mxu0 %v2036
        %2271 = vmatpush.xpose.msra.mxu0 %v2033
        %2272 = vmatpush.xpose.msra.mxu0 %v2030
        %2273 = vmatpush.xpose.msra.mxu0 %v2027
        %2274 = vmatpush.xpose.msra.mxu0 %v2024
        %2275 = vmatpush.xpose.msra.mxu0 %v2021
        %2276 = vmatpush.xpose.msra.mxu0 %v2018
        %2277 = vmatpush.xpose.msra.mxu0 %v2015
        %2278 = vmatpush.xpose.msra.mxu0 %v2012
        %2279 = vmatpush.xpose.msra.mxu0 %v2009
        %2280 = vmatpush.xpose.msra.mxu0 %v2006
        %2281 = vmatmul.f32.gmra.mxu0 %v1955
        %v2282 = vpop.f32.mrf.mxu0
        %v2283 = vadd.f32 %v1953, %v2282
        %2284 = vdwg.mxu0
        %2285 = vmatpush.xpose.msra.mxu0 %v2099
        %2286 = vmatpush.xpose.msra.mxu0 %v2096
        %2287 = vmatpush.xpose.msra.mxu0 %v2093
        %2288 = vmatpush.xpose.msra.mxu0 %v2090
        %2289 = vmatpush.xpose.msra.mxu0 %v2087
        %2290 = vmatpush.xpose.msra.mxu0 %v2084
        %2291 = vmatpush.xpose.msra.mxu0 %v2081
        %2292 = vmatpush.xpose.msra.mxu0 %v2078
        %2293 = vmatpush.xpose.msra.mxu0 %v2075
        %2294 = vmatpush.xpose.msra.mxu0 %v2072
        %2295 = vmatpush.xpose.msra.mxu0 %v2069
        %2296 = vmatpush.xpose.msra.mxu0 %v2066
        %2297 = vmatpush.xpose.msra.mxu0 %v2063
        %2298 = vmatpush.xpose.msra.mxu0 %v2060
        %2299 = vmatpush.xpose.msra.mxu0 %v2057
        %2300 = vmatpush.xpose.msra.mxu0 %v2054
        %2301 = vmatmul.f32.gmra.mxu0 %v1955
        %v2302 = vpop.f32.mrf.mxu0
        %v2303 = vadd.f32 %v1953, %v2302
        %2304 = vdwg.mxu0
        %2305 = vmatpush.xpose.msra.mxu0 %v2147
        %2306 = vmatpush.xpose.msra.mxu0 %v2144
        %2307 = vmatpush.xpose.msra.mxu0 %v2141
        %2308 = vmatpush.xpose.msra.mxu0 %v2138
        %2309 = vmatpush.xpose.msra.mxu0 %v2135
        %2310 = vmatpush.xpose.msra.mxu0 %v2132
        %2311 = vmatpush.xpose.msra.mxu0 %v2129
        %2312 = vmatpush.xpose.msra.mxu0 %v2126
        %2313 = vmatpush.xpose.msra.mxu0 %v2123
        %2314 = vmatpush.xpose.msra.mxu0 %v2120
        %2315 = vmatpush.xpose.msra.mxu0 %v2117
        %2316 = vmatpush.xpose.msra.mxu0 %v2114
        %2317 = vmatpush.xpose.msra.mxu0 %v2111
        %2318 = vmatpush.xpose.msra.mxu0 %v2108
        %2319 = vmatpush.xpose.msra.mxu0 %v2105
        %2320 = vmatpush.xpose.msra.mxu0 %v2102
        %2321 = vmatmul.f32.gmra.mxu0 %v1955
        %v2322 = vpop.f32.mrf.mxu0
        %v2323 = vadd.f32 %v1953, %v2322
        %2324 = vdwg.mxu0
        %2325 = vmatpush.xpose.msra.mxu0 %v2195
        %2326 = vmatpush.xpose.msra.mxu0 %v2192
        %2327 = vmatpush.xpose.msra.mxu0 %v2189
        %2328 = vmatpush.xpose.msra.mxu0 %v2186
        %2329 = vmatpush.xpose.msra.mxu0 %v2183
        %2330 = vmatpush.xpose.msra.mxu0 %v2180
        %2331 = vmatpush.xpose.msra.mxu0 %v2177
        %2332 = vmatpush.xpose.msra.mxu0 %v2174
        %2333 = vmatpush.xpose.msra.mxu0 %v2171
        %2334 = vmatpush.xpose.msra.mxu0 %v2168
        %2335 = vmatpush.xpose.msra.mxu0 %v2165
        %2336 = vmatpush.xpose.msra.mxu0 %v2162
        %2337 = vmatpush.xpose.msra.mxu0 %v2159
        %2338 = vmatpush.xpose.msra.mxu0 %v2156
        %2339 = vmatpush.xpose.msra.mxu0 %v2153
        %2340 = vmatpush.xpose.msra.mxu0 %v2150
        %2341 = vmatmul.f32.gmra.mxu0 %v1955
        %v2342 = vpop.f32.mrf.mxu0
        %v2343 = vadd.f32 %v1953, %v2342
        %2344 = vdwg.mxu0
        %2345 = vmatpush.xpose.msra.mxu0 %v2243
        %2346 = vmatpush.xpose.msra.mxu0 %v2240
        %2347 = vmatpush.xpose.msra.mxu0 %v2237
        %2348 = vmatpush.xpose.msra.mxu0 %v2234
        %2349 = vmatpush.xpose.msra.mxu0 %v2231
        %2350 = vmatpush.xpose.msra.mxu0 %v2228
        %2351 = vmatpush.xpose.msra.mxu0 %v2225
        %2352 = vmatpush.xpose.msra.mxu0 %v2222
        %2353 = vmatpush.xpose.msra.mxu0 %v2219
        %2354 = vmatpush.xpose.msra.mxu0 %v2216
        %2355 = vmatpush.xpose.msra.mxu0 %v2213
        %2356 = vmatpush.xpose.msra.mxu0 %v2210
        %2357 = vmatpush.xpose.msra.mxu0 %v2207
        %2358 = vmatpush.xpose.msra.mxu0 %v2204
        %2359 = vmatpush.xpose.msra.mxu0 %v2201
        %2360 = vmatpush.xpose.msra.mxu0 %v2198
        %2361 = vmatmul.f32.gmra.mxu0 %v1955
        %v2362 = vpop.f32.mrf.mxu0
        %v2363 = vadd.f32 %v1953, %v2362
        %2364 = vdwg.mxu0
        %2365 = vst [vmem:[%s718] sm:$0xff] %v2263
        %2366 = vst [vmem:[%s718 + $0x8] sm:$0xff] %v2283
        %2367 = vst [vmem:[%s718 + $0x10] sm:$0xff] %v2303
        %2368 = vst [vmem:[%s718 + $0x18] sm:$0xff] %v2323
        %2369 = vst [vmem:[%s718 + $0x20] sm:$0xff] %v2343
        %2370 = vst [vmem:[%s718 + $0x28] sm:$0xff] %v2363
        %s2371 = smul.u32 6, %s19
        %p2372 = scmp.lt.s32.totalorder %s2371, 11
        %s2373 = scalar_select %p2372, %s2371, 11
        %s2374 = smul.addr %s2373, 8
        %s2375 = scalar_lea.vmem %s7, %s2374
        // Predicated region
        $region87: #{edge_predictor_forward.1} parent=81 // pred_check
          %p2376 = pneg %p194
        $region88: #{edge_predictor_forward.1} parent=81 // pred_check_branch
          %2378 = sbr.rel (%p2376) target = $region90
        $region89: #{edge_predictor_forward.1} parent=81 // pred_region
          %s2379 = smul.u32 6, %s19
        $region90: #{edge_predictor_forward.1} parent=81 // pred_fallthru
          _
      $region82: #{edge_predictor_forward.1} parent=5 // pred_fallthru
        _
      %p2380 = scmp.le.s32.totalorder 2, %s14
      // Predicated region
      $region91: #{edge_predictor_forward.1} parent=5 // pred_check
        %p2381 = pneg %p2380
      $region92: #{edge_predictor_forward.1} parent=5 // pred_check_branch
        %2383 = sbr.rel (%p2381) target = $region94
      $region93: #{edge_predictor_forward.1} parent=5 // pred_region
        %s2384 = ssub.s32 %s14, 2
        // Predicated region
        $region95: #{edge_predictor_forward.1} parent=93 // pred_check
          %p2385 = pneg %p200
        $region96: #{edge_predictor_forward.1} parent=93 // pred_check_branch
          %2387 = sbr.rel (%p2385) target = $region98
        $region97: #{edge_predictor_forward.1} parent=93 // pred_region
          %s2388 = smul.u32 6, %s20
          %p2389 = scmp.lt.s32.totalorder %s2388, 11
          %s2390 = scalar_select %p2389, %s2388, 11
          %s2391 = smul.addr %s2390, 8
          %s2392 = scalar_lea.vmem %s7, %s2391
        $region98: #{edge_predictor_forward.1} parent=93 // pred_fallthru
          _
      $region94: #{edge_predictor_forward.1} parent=5 // pred_fallthru
        _
    $region6: #{edge_predictor_forward.1} parent=1 // loop_footer
      %s18 = sadd.s32 1, %s14
    $region7: #{edge_predictor_forward.1} parent=1 // loop_footer_branch
      %13 = sbr.rel target = $region3
    $region8: #{edge_predictor_forward.1} parent=1 // loop_exit
      _

</llo_original>
